<compile_context>
chip_gen: v5e
topology: v5e:2x2
jax: 0.10.0
libtpu: 0.0.40
codegen_flags: <defaults>
</compile_context>

<pallas_src>
import functools

import jax
import jax.numpy as jnp
from jax.experimental import pallas as pl
from jax.experimental.pallas import tpu as pltpu


# ----------------------------------------------------------------------------
# Kernel: one grid step processes `nb` whole images laid out as (nb, C, HWp)
# with the (possibly padded) spatial axis on lanes.
# ----------------------------------------------------------------------------
def _aff_kernel(x_ref, r_ref, w1_ref, b1l_ref, b1g_ref, w2l_ref, w2g_ref,
                b2_ref, o_ref, *, inv_hw):
    nb, _, _ = x_ref.shape
    two_ic = w1_ref.shape[0]
    ic = two_ic // 2

    # Small weights / biases loaded once per grid step; they stay resident.
    w1 = w1_ref[...]          # (2*IC, C)  [W1_local ; W1_global] stacked
    w2l = w2l_ref[...]        # (C, IC)
    w2g = w2g_ref[...]        # (C, IC)
    b1l = b1l_ref[...]        # (IC, 1)
    b1g = b1g_ref[...]        # (IC, 1)
    b2 = b2_ref[...]          # (C, 1)   b2_local + b2_global pre-summed

    # nb is small (<= 8) by construction: unrolled per-image 2-D MXU matmuls,
    # no batched-weight broadcasts and no leading-dim transposes.
    for i in range(nb):
        x_i = x_ref[i]                                             # (C, HWp)
        r_i = r_ref[i]
        xa = x_i + r_i

        # ---- layer 1: local + (pre-GAP) global share one MXU matmul ----
        t = jnp.dot(w1, xa, preferred_element_type=jnp.float32)    # (2IC, HWp)
        h = jnp.maximum(t[:ic] + b1l, 0.0)                         # local hidden
        # GAP commutes with the linear 1x1 conv; padded lanes hold zeros, so
        # lane-sum * 1/(H*W) is the exact spatial mean.
        hg = jnp.maximum(jnp.sum(t[ic:], axis=1, keepdims=True) * inv_hw + b1g,
                         0.0)                                      # (IC, 1)

        # ---- layer 2: full-width local matmul + tiny global column ----
        xl = jnp.dot(w2l, h, preferred_element_type=jnp.float32)   # (C, HWp)
        xg_col = jnp.dot(w2g, hg, preferred_element_type=jnp.float32)  # (C, 1)

        # Global contribution + fused bias is one column broadcast add.
        wei = jax.nn.sigmoid(xl + (xg_col + b2))
        # 2*x*wei + 2*r*(1-wei) == 2*(r + wei*(x - r))
        o_ref[i] = (2.0 * (r_i + wei * (x_i - r_i))).astype(o_ref.dtype)


def _pick_batch_block(n, c, hw_padded, vmem_block_budget=8 * 1024 * 1024,
                      max_unroll=8):
    """Pick how many images to fold into one grid step.

    Coarsen enough to amortize the ~0.35us/step pipeline overhead (aim for
    >= 512 sublane rows per step) but:
      * keep x/res/out double-buffered blocks inside a conservative VMEM
        budget that works on every generation (v7x has only 64 MiB physical),
      * keep the grid >= 4 steps so BlockSpec double-buffering actually
        overlaps DMA with compute (the kernel is HBM-bound),
      * prefer an even number of grid steps so the 'parallel' axis can be
        split across v7x's two TensorCores,
      * cap the in-kernel unroll factor.
    """
    per_img = 3 * c * hw_padded * 4               # x + res + out, f32
    target_nb = max(1, -(-512 // c))              # >= 512 sublane rows / step
    depth_cap = max(1, n // 4)                    # keep >= 4 grid steps
    cap = min(target_nb, depth_cap, max_unroll)

    def ok(d):
        return (n % d == 0 and d <= cap
                and 2 * d * per_img <= vmem_block_budget)

    candidates = [d for d in range(1, n + 1) if ok(d)]
    if not candidates:
        return 1
    even = [d for d in candidates if (n // d) % 2 == 0]
    return max(even) if even else max(candidates)


def aff_pallas(x, residual, params):
    """x, residual: (N, C, H, W) -> (N, C, H, W), same dtype as x."""
    N, C, H, W = x.shape
    HW = H * W
    IC = params["w1l"].shape[0]
    dtype = x.dtype

    # Native layout: NCHW is already (N, C, H*W)-contiguous -> free reshapes.
    xf = x.reshape(N, C, HW)
    rf = residual.reshape(N, C, HW)

    # Lane density: pad the spatial axis to a multiple of 128 (zeros) so all
    # stores are full-width; padded lanes are sliced off afterwards.  Zero
    # padding keeps the GAP exact (kernel scales the lane-sum by 1/(H*W)).
    HWp = -(-HW // 128) * 128
    if HWp != HW:
        pad = ((0, 0), (0, 0), (0, HWp - HW))
        xf = jnp.pad(xf, pad)
        rf = jnp.pad(rf, pad)

    # Weight prep (tiny, one-time): stack the two layer-1 weights so local and
    # global layer-1 share one matmul; keep biases in column (rows, 1) form so
    # they broadcast over the HW lane axis; pre-sum the layer-2 biases.
    w1 = jnp.concatenate([params["w1l"], params["w1g"]], axis=0)   # (2*IC, C)
    b1l = params["b1l"].reshape(IC, 1)
    b1g = params["b1g"].reshape(IC, 1)
    b2 = (params["b2l"] + params["b2g"]).reshape(C, 1)

    nb = _pick_batch_block(N, C, HWp)
    # TODO(synk): for very large images (e.g. 224x224 on v7x, 64 MiB VMEM) add
    # an HW grid axis ('arbitrary', last) and feed the per-image GAP(xa) from a
    # cheap pre-pass so only the local branch needs full-width blocks in VMEM.

    data_spec = pl.BlockSpec((nb, C, HWp), lambda g: (g, 0, 0))
    full2 = lambda a: pl.BlockSpec(a.shape, lambda g: (0, 0))

    kernel = functools.partial(_aff_kernel, inv_hw=1.0 / HW)

    out = pl.pallas_call(
        kernel,
        out_shape=jax.ShapeDtypeStruct((N, C, HWp), dtype),
        grid_spec=pltpu.PrefetchScalarGridSpec(
            num_scalar_prefetch=0,
            grid=(N // nb,),
            in_specs=[
                data_spec, data_spec,                        # x, residual
                full2(w1), full2(b1l), full2(b1g),           # layer 1 (conv+BN folded)
                full2(params["w2l"]), full2(params["w2g"]),  # layer 2 weights
                full2(b2),                                   # fused layer-2 bias
            ],
            out_specs=data_spec,
        ),
        compiler_params=pltpu.CompilerParams(
            dimension_semantics=("parallel",),
            # Conservative limit that fits v7x's scoped default as well.
            vmem_limit_bytes=32 * 1024 * 1024,
        ),
    )(xf, rf, w1, b1l, b1g, params["w2l"], params["w2g"], b2)

    if HWp != HW:
        out = out[:, :, :HW]
    return out.reshape(N, C, H, W)


# ----------------------------------------------------------------------------
# Parameter construction: deterministic 1x1-conv + BatchNorm params with the
# (inference-mode) BN folded into effective left-multiply weights/biases.
# ----------------------------------------------------------------------------
def _fold_conv_bn(key, c_in, c_out, eps=1e-5):
    k = jax.random.split(key, 6)
    w = jax.random.normal(k[0], (c_out, c_in), jnp.float32) * 0.1   # 1x1 conv weight
    b = jax.random.normal(k[1], (c_out,), jnp.float32) * 0.1        # conv bias
    gamma = 1.0 + 0.1 * jax.random.normal(k[2], (c_out,), jnp.float32)
    beta = 0.1 * jax.random.normal(k[3], (c_out,), jnp.float32)
    mean = 0.1 * jax.random.normal(k[4], (c_out,), jnp.float32)
    var = jax.nn.softplus(jax.random.normal(k[5], (c_out,), jnp.float32)) + 0.5
    scale = gamma / jnp.sqrt(var + eps)
    w_eff = w * scale[:, None]              # (c_out, c_in), left-multiply layout
    b_eff = (b - mean) * scale + beta       # (c_out,)
    return w_eff, b_eff


def make_aff_params(key, channels=64, r=4):
    ic = channels // r
    ks = jax.random.split(key, 4)
    w1l, b1l = _fold_conv_bn(ks[0], channels, ic)
    w2l, b2l = _fold_conv_bn(ks[1], ic, channels)
    w1g, b1g = _fold_conv_bn(ks[2], channels, ic)
    w2g, b2g = _fold_conv_bn(ks[3], ic, channels)
    return dict(w1l=w1l, b1l=b1l, w2l=w2l, b2l=b2l,
                w1g=w1g, b1g=b1g, w2g=w2g, b2g=b2g)


# Pure-JAX reference (same folded-BN semantics) for a correctness check.
def aff_ref(x, residual, p):
    N, C, H, W = x.shape
    xa = (x + residual).reshape(N, C, H * W)
    h = jnp.maximum(jnp.einsum('ic,ncp->nip', p["w1l"], xa) + p["b1l"][:, None], 0.0)
    xl = jnp.einsum('ci,nip->ncp', p["w2l"], h) + p["b2l"][:, None]
    g = jnp.mean(xa, axis=2)
    hg = jnp.maximum(jnp.einsum('ic,nc->ni', p["w1g"], g) + p["b1g"], 0.0)
    xg = jnp.einsum('ci,ni->nc', p["w2g"], hg) + p["b2g"]
    wei = jax.nn.sigmoid(xl + xg[:, :, None])
    out = (2.0 * x.reshape(N, C, H * W) * wei
           + 2.0 * residual.reshape(N, C, H * W) * (1.0 - wei))
    return out.reshape(N, C, H, W)


if __name__ == "__main__":
    key = jax.random.PRNGKey(0)
    k_param, k_x, k_r = jax.random.split(key, 3)

    # Module defaults: channels=64, r=4.  H*W=256 keeps the lane dim a multiple
    # of 128; N=8 gives an even, >=4-step pipelined grid (nb=2 -> grid=(4,)).
    N, C, H, W = 8, 64, 16, 16
    params = make_aff_params(k_param, channels=C, r=4)

    x = jax.random.normal(k_x, (N, C, H, W), jnp.float32)
    residual = jax.random.normal(k_r, (N, C, H, W), jnp.float32)

    out = jax.block_until_ready(aff_pallas(x, residual, params))
    ref = aff_ref(x, residual, params)

    assert out.shape == (N, C, H, W)
    assert out.dtype == x.dtype
    assert jnp.allclose(out, ref, atol=5e-4, rtol=5e-4), "mismatch vs JAX reference"

    print("KERNEL_OK")
</pallas_src>

<mosaic_0001>
module attributes {stable_mosaic.version = 11 : i64} {
  func.func @_aff_kernel(%arg0: i32, %arg1: memref<2x64x256xf32, #tpu.memory_space<vmem>>, %arg2: memref<2x64x256xf32, #tpu.memory_space<vmem>>, %arg3: memref<32x64xf32, #tpu.memory_space<vmem>>, %arg4: memref<16x1xf32, #tpu.memory_space<vmem>>, %arg5: memref<16x1xf32, #tpu.memory_space<vmem>>, %arg6: memref<64x16xf32, #tpu.memory_space<vmem>>, %arg7: memref<64x16xf32, #tpu.memory_space<vmem>>, %arg8: memref<64x1xf32, #tpu.memory_space<vmem>>, %arg9: memref<2x64x256xf32, #tpu.memory_space<vmem>>) attributes {dimension_semantics = [#tpu.dimension_semantics<parallel>], iteration_bounds = array<i64: 4>, scalar_prefetch = 0 : i64, scratch_operands = 0 : i64, tpu.core_type = #tpu.core_type<tc>, window_params = [{transform_indices = @transform_0, window_bounds = array<i64: 2, 64, 256>}, {transform_indices = @transform_1, window_bounds = array<i64: 2, 64, 256>}, {pipeline_mode = #tpu.pipeline_mode<synchronous>, transform_indices = @transform_2, window_bounds = array<i64: 32, 64>}, {pipeline_mode = #tpu.pipeline_mode<synchronous>, transform_indices = @transform_3, window_bounds = array<i64: 16, 1>}, {pipeline_mode = #tpu.pipeline_mode<synchronous>, transform_indices = @transform_4, window_bounds = array<i64: 16, 1>}, {pipeline_mode = #tpu.pipeline_mode<synchronous>, transform_indices = @transform_5, window_bounds = array<i64: 64, 16>}, {pipeline_mode = #tpu.pipeline_mode<synchronous>, transform_indices = @transform_6, window_bounds = array<i64: 64, 16>}, {pipeline_mode = #tpu.pipeline_mode<synchronous>, transform_indices = @transform_7, window_bounds = array<i64: 64, 1>}, {transform_indices = @transform_8, window_bounds = array<i64: 2, 64, 256>}]} {
    %c0 = arith.constant 0 : index
    %c0_0 = arith.constant 0 : index
    %0 = vector.load %arg3[%c0, %c0_0] : memref<32x64xf32, #tpu.memory_space<vmem>>, vector<32x64xf32>
    %c0_1 = arith.constant 0 : index
    %c0_2 = arith.constant 0 : index
    %1 = vector.load %arg6[%c0_1, %c0_2] : memref<64x16xf32, #tpu.memory_space<vmem>>, vector<64x16xf32>
    %c0_3 = arith.constant 0 : index
    %c0_4 = arith.constant 0 : index
    %2 = vector.load %arg7[%c0_3, %c0_4] : memref<64x16xf32, #tpu.memory_space<vmem>>, vector<64x16xf32>
    %c0_5 = arith.constant 0 : index
    %c0_6 = arith.constant 0 : index
    %3 = vector.load %arg4[%c0_5, %c0_6] : memref<16x1xf32, #tpu.memory_space<vmem>>, vector<16x1xf32>
    %c0_7 = arith.constant 0 : index
    %c0_8 = arith.constant 0 : index
    %4 = vector.load %arg5[%c0_7, %c0_8] : memref<16x1xf32, #tpu.memory_space<vmem>>, vector<16x1xf32>
    %c0_9 = arith.constant 0 : index
    %c0_10 = arith.constant 0 : index
    %5 = vector.load %arg8[%c0_9, %c0_10] : memref<64x1xf32, #tpu.memory_space<vmem>>, vector<64x1xf32>
    %c0_11 = arith.constant 0 : index
    %c0_12 = arith.constant 0 : index
    %c0_13 = arith.constant 0 : index
    %6 = vector.load %arg1[%c0_11, %c0_12, %c0_13] : memref<2x64x256xf32, #tpu.memory_space<vmem>>, vector<1x64x256xf32>
    %7 = vector.shape_cast %6 : vector<1x64x256xf32> to vector<64x256xf32>
    %c0_14 = arith.constant 0 : index
    %c0_15 = arith.constant 0 : index
    %c0_16 = arith.constant 0 : index
    %8 = vector.load %arg2[%c0_14, %c0_15, %c0_16] : memref<2x64x256xf32, #tpu.memory_space<vmem>>, vector<1x64x256xf32>
    %9 = vector.shape_cast %8 : vector<1x64x256xf32> to vector<64x256xf32>
    %10 = arith.addf %7, %9 : vector<64x256xf32>
    %cst = arith.constant dense<0.000000e+00> : vector<32x256xf32>
    %11 = tpu.matmul %0, %10, %cst {dimension_numbers = #tpu.dot_dimension_numbers<[1], [0], [0], [1], [0, 0, 1, 1], [], []>} : vector<32x64xf32>, vector<64x256xf32>, vector<32x256xf32> -> vector<32x256xf32>
    %12 = vector.extract_strided_slice %11 {offsets = [0, 0], sizes = [16, 256], strides = [1, 1]} : vector<32x256xf32> to vector<16x256xf32>
    %13 = vector.broadcast %3 : vector<16x1xf32> to vector<16x256xf32>
    %14 = arith.addf %12, %13 : vector<16x256xf32>
    %cst_17 = arith.constant 0.000000e+00 : f32
    %15 = vector.broadcast %cst_17 : f32 to vector<16x256xf32>
    %16 = arith.maximumf %14, %15 : vector<16x256xf32>
    %17 = vector.extract_strided_slice %11 {offsets = [16, 0], sizes = [16, 256], strides = [1, 1]} : vector<32x256xf32> to vector<16x256xf32>
    %cst_18 = arith.constant dense<0.000000e+00> : vector<16xf32>
    %18 = vector.multi_reduction <add>, %17, %cst_18 [1] : vector<16x256xf32> to vector<16xf32>
    %19 = vector.shape_cast %18 : vector<16xf32> to vector<16x1xf32>
    %cst_19 = arith.constant 3.906250e-03 : f32
    %20 = vector.broadcast %cst_19 : f32 to vector<16x1xf32>
    %21 = arith.mulf %19, %20 : vector<16x1xf32>
    %22 = arith.addf %21, %4 : vector<16x1xf32>
    %cst_20 = arith.constant 0.000000e+00 : f32
    %23 = vector.broadcast %cst_20 : f32 to vector<16x1xf32>
    %24 = arith.maximumf %22, %23 : vector<16x1xf32>
    %cst_21 = arith.constant dense<0.000000e+00> : vector<64x256xf32>
    %25 = tpu.matmul %1, %16, %cst_21 {dimension_numbers = #tpu.dot_dimension_numbers<[1], [0], [0], [1], [0, 0, 1, 1], [], []>} : vector<64x16xf32>, vector<16x256xf32>, vector<64x256xf32> -> vector<64x256xf32>
    %cst_22 = arith.constant dense<0.000000e+00> : vector<64x1xf32>
    %26 = tpu.matmul %2, %24, %cst_22 {dimension_numbers = #tpu.dot_dimension_numbers<[1], [0], [0], [1], [0, 0, 1, 1], [], []>} : vector<64x16xf32>, vector<16x1xf32>, vector<64x1xf32> -> vector<64x1xf32>
    %27 = arith.addf %26, %5 : vector<64x1xf32>
    %28 = vector.broadcast %27 : vector<64x1xf32> to vector<64x256xf32>
    %29 = arith.addf %25, %28 : vector<64x256xf32>
    %30 = arith.negf %29 : vector<64x256xf32>
    %31 = math.exp %30 : vector<64x256xf32>
    %cst_23 = arith.constant 1.000000e+00 : f32
    %32 = vector.broadcast %cst_23 : f32 to vector<64x256xf32>
    %33 = arith.addf %32, %31 : vector<64x256xf32>
    %34 = arith.divf %32, %33 : vector<64x256xf32>
    %35 = arith.subf %7, %9 : vector<64x256xf32>
    %36 = arith.mulf %34, %35 : vector<64x256xf32>
    %37 = arith.addf %9, %36 : vector<64x256xf32>
    %cst_24 = arith.constant 2.000000e+00 : f32
    %38 = vector.broadcast %cst_24 : f32 to vector<64x256xf32>
    %39 = arith.mulf %38, %37 : vector<64x256xf32>
    %c0_25 = arith.constant 0 : index
    %c0_26 = arith.constant 0 : index
    %c0_27 = arith.constant 0 : index
    %40 = vector.load %arg9[%c0_25, %c0_26, %c0_27] : memref<2x64x256xf32, #tpu.memory_space<vmem>>, vector<1x64x256xf32>
    %41 = vector.shape_cast %40 : vector<1x64x256xf32> to vector<64x256xf32>
    %42 = vector.shape_cast %39 : vector<64x256xf32> to vector<1x64x256xf32>
    tpu.vector_store %arg9[%c0_25, %c0_26, %c0_27], %42 {strides = array<i32>} : memref<2x64x256xf32, #tpu.memory_space<vmem>>, vector<1x64x256xf32>,
    %c1 = arith.constant 1 : index
    %c0_28 = arith.constant 0 : index
    %c0_29 = arith.constant 0 : index
    %43 = vector.load %arg1[%c1, %c0_28, %c0_29] : memref<2x64x256xf32, #tpu.memory_space<vmem>>, vector<1x64x256xf32>
    %44 = vector.shape_cast %43 : vector<1x64x256xf32> to vector<64x256xf32>
    %c1_30 = arith.constant 1 : index
    %c0_31 = arith.constant 0 : index
    %c0_32 = arith.constant 0 : index
    %45 = vector.load %arg2[%c1_30, %c0_31, %c0_32] : memref<2x64x256xf32, #tpu.memory_space<vmem>>, vector<1x64x256xf32>
    %46 = vector.shape_cast %45 : vector<1x64x256xf32> to vector<64x256xf32>
    %47 = arith.addf %44, %46 : vector<64x256xf32>
    %cst_33 = arith.constant dense<0.000000e+00> : vector<32x256xf32>
    %48 = tpu.matmul %0, %47, %cst_33 {dimension_numbers = #tpu.dot_dimension_numbers<[1], [0], [0], [1], [0, 0, 1, 1], [], []>} : vector<32x64xf32>, vector<64x256xf32>, vector<32x256xf32> -> vector<32x256xf32>
    %49 = vector.extract_strided_slice %48 {offsets = [0, 0], sizes = [16, 256], strides = [1, 1]} : vector<32x256xf32> to vector<16x256xf32>
    %50 = vector.broadcast %3 : vector<16x1xf32> to vector<16x256xf32>
    %51 = arith.addf %49, %50 : vector<16x256xf32>
    %cst_34 = arith.constant 0.000000e+00 : f32
    %52 = vector.broadcast %cst_34 : f32 to vector<16x256xf32>
    %53 = arith.maximumf %51, %52 : vector<16x256xf32>
    %54 = vector.extract_strided_slice %48 {offsets = [16, 0], sizes = [16, 256], strides = [1, 1]} : vector<32x256xf32> to vector<16x256xf32>
    %cst_35 = arith.constant dense<0.000000e+00> : vector<16xf32>
    %55 = vector.multi_reduction <add>, %54, %cst_35 [1] : vector<16x256xf32> to vector<16xf32>
    %56 = vector.shape_cast %55 : vector<16xf32> to vector<16x1xf32>
    %cst_36 = arith.constant 3.906250e-03 : f32
    %57 = vector.broadcast %cst_36 : f32 to vector<16x1xf32>
    %58 = arith.mulf %56, %57 : vector<16x1xf32>
    %59 = arith.addf %58, %4 : vector<16x1xf32>
    %cst_37 = arith.constant 0.000000e+00 : f32
    %60 = vector.broadcast %cst_37 : f32 to vector<16x1xf32>
    %61 = arith.maximumf %59, %60 : vector<16x1xf32>
    %cst_38 = arith.constant dense<0.000000e+00> : vector<64x256xf32>
    %62 = tpu.matmul %1, %53, %cst_38 {dimension_numbers = #tpu.dot_dimension_numbers<[1], [0], [0], [1], [0, 0, 1, 1], [], []>} : vector<64x16xf32>, vector<16x256xf32>, vector<64x256xf32> -> vector<64x256xf32>
    %cst_39 = arith.constant dense<0.000000e+00> : vector<64x1xf32>
    %63 = tpu.matmul %2, %61, %cst_39 {dimension_numbers = #tpu.dot_dimension_numbers<[1], [0], [0], [1], [0, 0, 1, 1], [], []>} : vector<64x16xf32>, vector<16x1xf32>, vector<64x1xf32> -> vector<64x1xf32>
    %64 = arith.addf %63, %5 : vector<64x1xf32>
    %65 = vector.broadcast %64 : vector<64x1xf32> to vector<64x256xf32>
    %66 = arith.addf %62, %65 : vector<64x256xf32>
    %67 = arith.negf %66 : vector<64x256xf32>
    %68 = math.exp %67 : vector<64x256xf32>
    %cst_40 = arith.constant 1.000000e+00 : f32
    %69 = vector.broadcast %cst_40 : f32 to vector<64x256xf32>
    %70 = arith.addf %69, %68 : vector<64x256xf32>
    %71 = arith.divf %69, %70 : vector<64x256xf32>
    %72 = arith.subf %44, %46 : vector<64x256xf32>
    %73 = arith.mulf %71, %72 : vector<64x256xf32>
    %74 = arith.addf %46, %73 : vector<64x256xf32>
    %cst_41 = arith.constant 2.000000e+00 : f32
    %75 = vector.broadcast %cst_41 : f32 to vector<64x256xf32>
    %76 = arith.mulf %75, %74 : vector<64x256xf32>
    %c1_42 = arith.constant 1 : index
    %c0_43 = arith.constant 0 : index
    %c0_44 = arith.constant 0 : index
    %77 = vector.load %arg9[%c1_42, %c0_43, %c0_44] : memref<2x64x256xf32, #tpu.memory_space<vmem>>, vector<1x64x256xf32>
    %78 = vector.shape_cast %77 : vector<1x64x256xf32> to vector<64x256xf32>
    %79 = vector.shape_cast %76 : vector<64x256xf32> to vector<1x64x256xf32>
    tpu.vector_store %arg9[%c1_42, %c0_43, %c0_44], %79 {strides = array<i32>} : memref<2x64x256xf32, #tpu.memory_space<vmem>>, vector<1x64x256xf32>,
    return
  }
  func.func @transform_0(%arg0: i32) -> (i32, i32, i32) {
    %c0_i32 = arith.constant 0 : i32
    %c0_i32_0 = arith.constant 0 : i32
    %c0_i32_1 = arith.constant 0 : i32
    return %arg0, %c0_i32, %c0_i32_0 : i32, i32, i32
  }
  func.func @transform_1(%arg0: i32) -> (i32, i32, i32) {
    %c0_i32 = arith.constant 0 : i32
    %c0_i32_0 = arith.constant 0 : i32
    %c0_i32_1 = arith.constant 0 : i32
    return %arg0, %c0_i32, %c0_i32_0 : i32, i32, i32
  }
  func.func @transform_2(%arg0: i32) -> (i32, i32) {
    %c0_i32 = arith.constant 0 : i32
    %c0_i32_0 = arith.constant 0 : i32
    %c0_i32_1 = arith.constant 0 : i32
    return %c0_i32, %c0_i32_0 : i32, i32
  }
  func.func @transform_3(%arg0: i32) -> (i32, i32) {
    %c0_i32 = arith.constant 0 : i32
    %c0_i32_0 = arith.constant 0 : i32
    %c0_i32_1 = arith.constant 0 : i32
    return %c0_i32, %c0_i32_0 : i32, i32
  }
  func.func @transform_4(%arg0: i32) -> (i32, i32) {
    %c0_i32 = arith.constant 0 : i32
    %c0_i32_0 = arith.constant 0 : i32
    %c0_i32_1 = arith.constant 0 : i32
    return %c0_i32, %c0_i32_0 : i32, i32
  }
  func.func @transform_5(%arg0: i32) -> (i32, i32) {
    %c0_i32 = arith.constant 0 : i32
    %c0_i32_0 = arith.constant 0 : i32
    %c0_i32_1 = arith.constant 0 : i32
    return %c0_i32, %c0_i32_0 : i32, i32
  }
  func.func @transform_6(%arg0: i32) -> (i32, i32) {
    %c0_i32 = arith.constant 0 : i32
    %c0_i32_0 = arith.constant 0 : i32
    %c0_i32_1 = arith.constant 0 : i32
    return %c0_i32, %c0_i32_0 : i32, i32
  }
  func.func @transform_7(%arg0: i32) -> (i32, i32) {
    %c0_i32 = arith.constant 0 : i32
    %c0_i32_0 = arith.constant 0 : i32
    %c0_i32_1 = arith.constant 0 : i32
    return %c0_i32, %c0_i32_0 : i32, i32
  }
  func.func @transform_8(%arg0: i32) -> (i32, i32, i32) {
    %c0_i32 = arith.constant 0 : i32
    %c0_i32_0 = arith.constant 0 : i32
    %c0_i32_1 = arith.constant 0 : i32
    return %arg0, %c0_i32, %c0_i32_0 : i32, i32, i32
  }
}

</mosaic_0001>

<llo_original>
// kernel: tpu_custom_call.1
$region0: #{tpu_custom_call.1}
  #allocation0 [shape = 'u32[]', space=smem, size = 0x4, offset = 0x4, fixed_abs, tag = 'smem constant byte address 0x4 - core index']
  #allocation1 [shape = 'u32[72,128]{1,0:T(1,128)}', space=vmem, size = 0x9000, scoped, tag = 'internal scratch']
  %s0 = inlined_call_operand.hbm [shape: f32[8,64,256], index: 0, kind: input, shape index: {}]
  %s1 = inlined_call_operand.hbm [shape: f32[8,64,256], index: 1, kind: input, shape index: {}]
  %s2 = inlined_call_operand.vmem [shape: f32[32,64], index: 2, kind: input, shape index: {}]
  %s3 = inlined_call_operand.vmem [shape: f32[16,1], index: 3, kind: input, shape index: {}]
  %s4 = inlined_call_operand.vmem [shape: f32[16,1], index: 4, kind: input, shape index: {}]
  %s5 = inlined_call_operand.vmem [shape: f32[64,16], index: 5, kind: input, shape index: {}]
  %s6 = inlined_call_operand.vmem [shape: f32[64,16], index: 6, kind: input, shape index: {}]
  %s7 = inlined_call_operand.vmem [shape: f32[64,1], index: 7, kind: input, shape index: {}]
  %s8 = inlined_call_operand.hbm [shape: f32[8,64,256], index: 8, kind: output, shape index: {}]
  %s9 = sld [smem:[#allocation0]]
  $region73: #{tpu_custom_call.1} parent=0
    _
  %s11 = ssub.s32 1, %s9
  %s12 = scalar_select 0, %s11, %s9
  $region1: #{tpu_custom_call.1} parent=0
    #allocation2 [shape = 'u8[262144]{0}', space=vmem, size = 0x40000, scoped, tag = 'input window, operand 0']
    #allocation3 [shape = 's32[2]{0}', space=sflag, size = 0x8, scoped, tag = 'scoped memory for tpu_custom_call.1']
    #allocation4 [shape = 's32[2]{0}', space=sflag, size = 0x8, scoped, tag = 'scoped memory for tpu_custom_call.1']
    #allocation5 [shape = 'u8[262144]{0}', space=vmem, size = 0x40000, scoped, tag = 'input window, operand 1']
    #allocation6 [shape = 's32[2]{0}', space=sflag, size = 0x8, scoped, tag = 'scoped memory for tpu_custom_call.1']
    #allocation7 [shape = 'u8[262144]{0}', space=vmem, size = 0x40000, scoped, tag = 'output window, operand 0']
    %13 = vsyncpa [#allocation3], 0
    %s14 = scalar_lea.sflag [#allocation3], 1
    %15 = vsyncpa %s14, 0
    %16 = vsyncpa [#allocation6], 0
    %s17 = scalar_lea.sflag [#allocation6], 1
    %18 = vsyncpa %s17, 0
    %19 = vsyncpa [#allocation4], 0
    %s20 = scalar_lea.sflag [#allocation4], 1
    %21 = vsyncpa %s20, 0
    loop: start=0, step=1, limit=6
    $region2: #{tpu_custom_call.1} parent=1 // loop_pre_header
      _
    $region3: #{tpu_custom_call.1} parent=1 // loop_header
      %s23 = sphi 0, %s27
      %p24 = scmp.ge.s32.totalorder %s23, 6
      %s33 = sphi 0, %s35
      %s36 = sphi 0, %s33
      %s37 = sphi 0, %s36
      %s53 = sphi 0, %s37
      %s59 = sphi 0, %s61
      %s62 = sphi 0, %s59
      %s63 = sphi 0, %s62
      %s79 = sphi 0, %s63
      %s83 = sphi 0, %s83
      %s85 = sphi 0, %s83
      %s86 = sphi 0, %s85
      %s100 = sphi 0, %s86
      %s104 = sphi 0, %s104
      %s106 = sphi 0, %s104
      %s107 = sphi 0, %s106
      %s121 = sphi 0, %s107
      %s125 = sphi 0, %s125
      %s127 = sphi 0, %s125
      %s128 = sphi 0, %s127
      %s142 = sphi 0, %s128
      %s146 = sphi 0, %s146
      %s148 = sphi 0, %s146
      %s149 = sphi 0, %s148
      %s163 = sphi 0, %s149
      %s167 = sphi 0, %s167
      %s169 = sphi 0, %s167
      %s170 = sphi 0, %s169
      %s184 = sphi 0, %s170
      %s188 = sphi 0, %s188
      %s190 = sphi 0, %s188
      %s191 = sphi 0, %s190
      %s205 = sphi 0, %s191
      %s211 = sphi 0, %s213
      %s214 = sphi 0, %s211
      %s215 = sphi 0, %s214
      %s231 = sphi 0, %s215
    $region4: #{tpu_custom_call.1} parent=1 // loop_header_branch
      %26 = sbr.rel (%p24) target = $region8
    $region5: #{tpu_custom_call.1} parent=1 // loop_body
      %s28 = ssub.s32 %s23, 1
      %s29 = ssub.s32 %s23, 2
      %s30 = sadd.s32 %s23, 1
      %s31 = ssub.s32 %s23, %s30
      %p32 = scmp.eq.s32.totalorder %s31, 0
      %s34 = sadd.s32 %s33, 1
      %s35 = scalar_select %p32, %s33, %s34
      %p38 = pneg %p32
      %p39 = scmp.eq.s32.totalorder %s23, 3
      %p40 = por %p38, %p39
      %p41 = scmp.ne.s32.totalorder %s33, %s36
      %p42 = scmp.eq.s32.totalorder %s23, 0
      %p43 = por %p41, %p42
      %p44 = scmp.ne.s32.totalorder %s33, %s36
      %p45 = scmp.eq.s32.totalorder %s28, 3
      %p46 = por %p44, %p45
      %p47 = scmp.ne.s32.totalorder %s36, %s37
      %p48 = scmp.eq.s32.totalorder %s28, 0
      %p49 = por %p47, %p48
      %p50 = scmp.ne.s32.totalorder %s36, %s37
      %p51 = scmp.eq.s32.totalorder %s29, 3
      %p52 = por %p50, %p51
      %p54 = scmp.ne.s32.totalorder %s37, %s53
      %p55 = scmp.eq.s32.totalorder %s29, 0
      %p56 = por %p54, %p55
      %s57 = ssub.s32 %s23, %s30
      %p58 = scmp.eq.s32.totalorder %s57, 0
      %s60 = sadd.s32 %s59, 1
      %s61 = scalar_select %p58, %s59, %s60
      %p64 = pneg %p58
      %p65 = scmp.eq.s32.totalorder %s23, 3
      %p66 = por %p64, %p65
      %p67 = scmp.ne.s32.totalorder %s59, %s62
      %p68 = scmp.eq.s32.totalorder %s23, 0
      %p69 = por %p67, %p68
      %p70 = scmp.ne.s32.totalorder %s59, %s62
      %p71 = scmp.eq.s32.totalorder %s28, 3
      %p72 = por %p70, %p71
      %p73 = scmp.ne.s32.totalorder %s62, %s63
      %p74 = scmp.eq.s32.totalorder %s28, 0
      %p75 = por %p73, %p74
      %p76 = scmp.ne.s32.totalorder %s62, %s63
      %p77 = scmp.eq.s32.totalorder %s29, 3
      %p78 = por %p76, %p77
      %p80 = scmp.ne.s32.totalorder %s63, %s79
      %p81 = scmp.eq.s32.totalorder %s29, 0
      %p82 = por %p80, %p81
      %s84 = sadd.s32 %s83, 1
      %p87 = scmp.eq.s32.totalorder %s23, 3
      %p88 = scmp.ne.s32.totalorder %s83, %s85
      %p89 = scmp.eq.s32.totalorder %s23, 0
      %p90 = por %p88, %p89
      %p91 = scmp.ne.s32.totalorder %s83, %s85
      %p92 = scmp.eq.s32.totalorder %s28, 3
      %p93 = por %p91, %p92
      %p94 = scmp.ne.s32.totalorder %s85, %s86
      %p95 = scmp.eq.s32.totalorder %s28, 0
      %p96 = por %p94, %p95
      %p97 = scmp.ne.s32.totalorder %s85, %s86
      %p98 = scmp.eq.s32.totalorder %s29, 3
      %p99 = por %p97, %p98
      %p101 = scmp.ne.s32.totalorder %s86, %s100
      %p102 = scmp.eq.s32.totalorder %s29, 0
      %p103 = por %p101, %p102
      %s105 = sadd.s32 %s104, 1
      %p108 = scmp.eq.s32.totalorder %s23, 3
      %p109 = scmp.ne.s32.totalorder %s104, %s106
      %p110 = scmp.eq.s32.totalorder %s23, 0
      %p111 = por %p109, %p110
      %p112 = scmp.ne.s32.totalorder %s104, %s106
      %p113 = scmp.eq.s32.totalorder %s28, 3
      %p114 = por %p112, %p113
      %p115 = scmp.ne.s32.totalorder %s106, %s107
      %p116 = scmp.eq.s32.totalorder %s28, 0
      %p117 = por %p115, %p116
      %p118 = scmp.ne.s32.totalorder %s106, %s107
      %p119 = scmp.eq.s32.totalorder %s29, 3
      %p120 = por %p118, %p119
      %p122 = scmp.ne.s32.totalorder %s107, %s121
      %p123 = scmp.eq.s32.totalorder %s29, 0
      %p124 = por %p122, %p123
      %s126 = sadd.s32 %s125, 1
      %p129 = scmp.eq.s32.totalorder %s23, 3
      %p130 = scmp.ne.s32.totalorder %s125, %s127
      %p131 = scmp.eq.s32.totalorder %s23, 0
      %p132 = por %p130, %p131
      %p133 = scmp.ne.s32.totalorder %s125, %s127
      %p134 = scmp.eq.s32.totalorder %s28, 3
      %p135 = por %p133, %p134
      %p136 = scmp.ne.s32.totalorder %s127, %s128
      %p137 = scmp.eq.s32.totalorder %s28, 0
      %p138 = por %p136, %p137
      %p139 = scmp.ne.s32.totalorder %s127, %s128
      %p140 = scmp.eq.s32.totalorder %s29, 3
      %p141 = por %p139, %p140
      %p143 = scmp.ne.s32.totalorder %s128, %s142
      %p144 = scmp.eq.s32.totalorder %s29, 0
      %p145 = por %p143, %p144
      %s147 = sadd.s32 %s146, 1
      %p150 = scmp.eq.s32.totalorder %s23, 3
      %p151 = scmp.ne.s32.totalorder %s146, %s148
      %p152 = scmp.eq.s32.totalorder %s23, 0
      %p153 = por %p151, %p152
      %p154 = scmp.ne.s32.totalorder %s146, %s148
      %p155 = scmp.eq.s32.totalorder %s28, 3
      %p156 = por %p154, %p155
      %p157 = scmp.ne.s32.totalorder %s148, %s149
      %p158 = scmp.eq.s32.totalorder %s28, 0
      %p159 = por %p157, %p158
      %p160 = scmp.ne.s32.totalorder %s148, %s149
      %p161 = scmp.eq.s32.totalorder %s29, 3
      %p162 = por %p160, %p161
      %p164 = scmp.ne.s32.totalorder %s149, %s163
      %p165 = scmp.eq.s32.totalorder %s29, 0
      %p166 = por %p164, %p165
      %s168 = sadd.s32 %s167, 1
      %p171 = scmp.eq.s32.totalorder %s23, 3
      %p172 = scmp.ne.s32.totalorder %s167, %s169
      %p173 = scmp.eq.s32.totalorder %s23, 0
      %p174 = por %p172, %p173
      %p175 = scmp.ne.s32.totalorder %s167, %s169
      %p176 = scmp.eq.s32.totalorder %s28, 3
      %p177 = por %p175, %p176
      %p178 = scmp.ne.s32.totalorder %s169, %s170
      %p179 = scmp.eq.s32.totalorder %s28, 0
      %p180 = por %p178, %p179
      %p181 = scmp.ne.s32.totalorder %s169, %s170
      %p182 = scmp.eq.s32.totalorder %s29, 3
      %p183 = por %p181, %p182
      %p185 = scmp.ne.s32.totalorder %s170, %s184
      %p186 = scmp.eq.s32.totalorder %s29, 0
      %p187 = por %p185, %p186
      %s189 = sadd.s32 %s188, 1
      %p192 = scmp.eq.s32.totalorder %s23, 3
      %p193 = scmp.ne.s32.totalorder %s188, %s190
      %p194 = scmp.eq.s32.totalorder %s23, 0
      %p195 = por %p193, %p194
      %p196 = scmp.ne.s32.totalorder %s188, %s190
      %p197 = scmp.eq.s32.totalorder %s28, 3
      %p198 = por %p196, %p197
      %p199 = scmp.ne.s32.totalorder %s190, %s191
      %p200 = scmp.eq.s32.totalorder %s28, 0
      %p201 = por %p199, %p200
      %p202 = scmp.ne.s32.totalorder %s190, %s191
      %p203 = scmp.eq.s32.totalorder %s29, 3
      %p204 = por %p202, %p203
      %p206 = scmp.ne.s32.totalorder %s191, %s205
      %p207 = scmp.eq.s32.totalorder %s29, 0
      %p208 = por %p206, %p207
      %s209 = ssub.s32 %s23, %s30
      %p210 = scmp.eq.s32.totalorder %s209, 0
      %s212 = sadd.s32 %s211, 1
      %s213 = scalar_select %p210, %s211, %s212
      %p216 = pneg %p210
      %p217 = scmp.eq.s32.totalorder %s23, 3
      %p218 = por %p216, %p217
      %p219 = scmp.ne.s32.totalorder %s211, %s214
      %p220 = scmp.eq.s32.totalorder %s23, 0
      %p221 = por %p219, %p220
      %p222 = scmp.ne.s32.totalorder %s211, %s214
      %p223 = scmp.eq.s32.totalorder %s28, 3
      %p224 = por %p222, %p223
      %p225 = scmp.ne.s32.totalorder %s214, %s215
      %p226 = scmp.eq.s32.totalorder %s28, 0
      %p227 = por %p225, %p226
      %p228 = scmp.ne.s32.totalorder %s214, %s215
      %p229 = scmp.eq.s32.totalorder %s29, 3
      %p230 = por %p228, %p229
      %p232 = scmp.ne.s32.totalorder %s215, %s231
      %p233 = scmp.eq.s32.totalorder %s29, 0
      %p234 = por %p232, %p233
      %p235 = scmp.le.s32.totalorder 1, %s23
      %p236 = scmp.lt.s32.totalorder %s23, 5
      %p237 = pnand %p235, %p236
      %p238 = pneg %p237
      // Predicated region
      $region9: #{tpu_custom_call.1} parent=5 // pred_check
        _
      $region10: #{tpu_custom_call.1} parent=5 // pred_check_branch
        %240 = sbr.rel (%p237) target = $region12
      $region11: #{tpu_custom_call.1} parent=5 // pred_region
        %s241 = ssub.s32 %s23, 1
        // Predicated region
        $region13: #{tpu_custom_call.1} parent=11 // pred_check
          %p242 = pneg %p96
        $region14: #{tpu_custom_call.1} parent=11 // pred_check_branch
          %244 = sbr.rel (%p242) target = $region16
        $region15: #{tpu_custom_call.1} parent=11 // pred_region
          _
        $region16: #{tpu_custom_call.1} parent=11 // pred_fallthru
          _
        // Predicated region
        $region17: #{tpu_custom_call.1} parent=11 // pred_check
          %p245 = pneg %p117
        $region18: #{tpu_custom_call.1} parent=11 // pred_check_branch
          %247 = sbr.rel (%p245) target = $region20
        $region19: #{tpu_custom_call.1} parent=11 // pred_region
          _
        $region20: #{tpu_custom_call.1} parent=11 // pred_fallthru
          _
        // Predicated region
        $region21: #{tpu_custom_call.1} parent=11 // pred_check
          %p248 = pneg %p138
        $region22: #{tpu_custom_call.1} parent=11 // pred_check_branch
          %250 = sbr.rel (%p248) target = $region24
        $region23: #{tpu_custom_call.1} parent=11 // pred_region
          _
        $region24: #{tpu_custom_call.1} parent=11 // pred_fallthru
          _
        // Predicated region
        $region25: #{tpu_custom_call.1} parent=11 // pred_check
          %p251 = pneg %p159
        $region26: #{tpu_custom_call.1} parent=11 // pred_check_branch
          %253 = sbr.rel (%p251) target = $region28
        $region27: #{tpu_custom_call.1} parent=11 // pred_region
          _
        $region28: #{tpu_custom_call.1} parent=11 // pred_fallthru
          _
        // Predicated region
        $region29: #{tpu_custom_call.1} parent=11 // pred_check
          %p254 = pneg %p180
        $region30: #{tpu_custom_call.1} parent=11 // pred_check_branch
          %256 = sbr.rel (%p254) target = $region32
        $region31: #{tpu_custom_call.1} parent=11 // pred_region
          _
        $region32: #{tpu_custom_call.1} parent=11 // pred_fallthru
          _
        // Predicated region
        $region33: #{tpu_custom_call.1} parent=11 // pred_check
          %p257 = pneg %p201
        $region34: #{tpu_custom_call.1} parent=11 // pred_check_branch
          %259 = sbr.rel (%p257) target = $region36
        $region35: #{tpu_custom_call.1} parent=11 // pred_region
          _
        $region36: #{tpu_custom_call.1} parent=11 // pred_fallthru
          _
      $region12: #{tpu_custom_call.1} parent=5 // pred_fallthru
        _
      %p260 = scmp.lt.s32.totalorder %s23, 4
      // Predicated region
      $region37: #{tpu_custom_call.1} parent=5 // pred_check
        %p261 = pneg %p260
      $region38: #{tpu_custom_call.1} parent=5 // pred_check_branch
        %263 = sbr.rel (%p261) target = $region40
      $region39: #{tpu_custom_call.1} parent=5 // pred_region
        // Predicated region
        $region41: #{tpu_custom_call.1} parent=39 // pred_check
          %p264 = pneg %p43
        $region42: #{tpu_custom_call.1} parent=39 // pred_check_branch
          %266 = sbr.rel (%p264) target = $region44
        $region43: #{tpu_custom_call.1} parent=39 // pred_region
          %s267 = sand.u32 %s33, 1
          %s268 = scalar_lea.sflag [#allocation3], %s267
          %s269 = sand.u32 %s33, 1
          %s270 = smul.addr %s269, 256
          %s271 = scalar_lea.vmem [#allocation2], %s270
          %s272 = smul.u32 2, %s23
          %274 = vsyncadd %s268, 0
          %s275 = smul.addr %s272, 16
          %s276 = smul.addr %s275, 8
          %s277 = scalar_lea.hbm %s0, %s276
          %s278 = sshll.u32 %s277, 4
          %s279 = int_to_ptr.hbm [resolvable:$true] %s278
          %s280 = sshll.u32 %s271, 4
          %s281 = int_to_ptr.vmem [resolvable:$true] %s280
          %286 = dma.hbm_to_vmem [thread:$0]  %s279, 4096, %s281, %s268, 256, 256, 16
        $region44: #{tpu_custom_call.1} parent=39 // pred_fallthru
          _
        // Predicated region
        $region45: #{tpu_custom_call.1} parent=39 // pred_check
          %p287 = pneg %p69
        $region46: #{tpu_custom_call.1} parent=39 // pred_check_branch
          %289 = sbr.rel (%p287) target = $region48
        $region47: #{tpu_custom_call.1} parent=39 // pred_region
          %s290 = sand.u32 %s59, 1
          %s291 = scalar_lea.sflag [#allocation6], %s290
          %s292 = sand.u32 %s59, 1
          %s293 = smul.addr %s292, 256
          %s294 = scalar_lea.vmem [#allocation5], %s293
          %s295 = smul.u32 2, %s23
          %297 = vsyncadd %s291, 0
          %s298 = smul.addr %s295, 16
          %s299 = smul.addr %s298, 8
          %s300 = scalar_lea.hbm %s1, %s299
          %s301 = sshll.u32 %s300, 4
          %s302 = int_to_ptr.hbm [resolvable:$true] %s301
          %s303 = sshll.u32 %s294, 4
          %s304 = int_to_ptr.vmem [resolvable:$true] %s303
          %309 = dma.hbm_to_vmem [thread:$0]  %s302, 4096, %s304, %s291, 256, 256, 16
        $region48: #{tpu_custom_call.1} parent=39 // pred_fallthru
          _
      $region40: #{tpu_custom_call.1} parent=5 // pred_fallthru
        _
      %p310 = scmp.le.s32.totalorder 1, %s23
      %p311 = scmp.lt.s32.totalorder %s23, 5
      %p312 = pnand %p310, %p311
      %p313 = pneg %p312
      // Predicated region
      $region49: #{tpu_custom_call.1} parent=5 // pred_check
        _
      $region50: #{tpu_custom_call.1} parent=5 // pred_check_branch
        %315 = sbr.rel (%p312) target = $region52
      $region51: #{tpu_custom_call.1} parent=5 // pred_region
        %s316 = ssub.s32 %s23, 1
        %s317 = sand.u32 %s36, 1
        %s318 = scalar_lea.sflag [#allocation3], %s317
        %s319 = sand.u32 %s36, 1
        %s320 = smul.addr %s319, 256
        %s321 = scalar_lea.vmem [#allocation2], %s320
        // Predicated region
        $region53: #{tpu_custom_call.1} parent=51 // pred_check
          %p322 = pneg %p49
        $region54: #{tpu_custom_call.1} parent=51 // pred_check_branch
          %324 = sbr.rel (%p322) target = $region56
        $region55: #{tpu_custom_call.1} parent=51 // pred_region
          %326 = dma.done %s318, 4096
        $region56: #{tpu_custom_call.1} parent=51 // pred_fallthru
          _
        %s327 = sand.u32 %s62, 1
        %s328 = scalar_lea.sflag [#allocation6], %s327
        %s329 = sand.u32 %s62, 1
        %s330 = smul.addr %s329, 256
        %s331 = scalar_lea.vmem [#allocation5], %s330
        // Predicated region
        $region57: #{tpu_custom_call.1} parent=51 // pred_check
          %p332 = pneg %p75
        $region58: #{tpu_custom_call.1} parent=51 // pred_check_branch
          %334 = sbr.rel (%p332) target = $region60
        $region59: #{tpu_custom_call.1} parent=51 // pred_region
          %336 = dma.done %s328, 4096
        $region60: #{tpu_custom_call.1} parent=51 // pred_fallthru
          _
        %s337 = sand.u32 %s36, 1
        %s338 = scalar_lea.sflag [#allocation3], %s337
        %s339 = sand.u32 %s36, 1
        %s340 = smul.addr %s339, 256
        %s341 = scalar_lea.vmem [#allocation2], %s340
        %p342 = pneg %p49
        %p343 = pneg %p46
        %s344 = sand.u32 %s62, 1
        %s345 = scalar_lea.sflag [#allocation6], %s344
        %s346 = sand.u32 %s62, 1
        %s347 = smul.addr %s346, 256
        %s348 = scalar_lea.vmem [#allocation5], %s347
        %p349 = pneg %p75
        %p350 = pneg %p72
        %p351 = pneg %p96
        %p352 = pneg %p93
        %p353 = pneg %p117
        %p354 = pneg %p114
        %p355 = pneg %p138
        %p356 = pneg %p135
        %p357 = pneg %p159
        %p358 = pneg %p156
        %p359 = pneg %p180
        %p360 = pneg %p177
        %p361 = pneg %p201
        %p362 = pneg %p198
        %p363 = pneg %p227
        %p364 = pneg %p224
        %s365 = sand.u32 %s214, 1
        %s366 = scalar_lea.sflag [#allocation4], %s365
        %s367 = sand.u32 %s214, 1
        %s368 = smul.addr %s367, 256
        %s369 = scalar_lea.vmem [#allocation7], %s368
        %s370 = smul.u32 2, %s28
        %s371 = smul.u32 2, %s28
        %s372 = smul.u32 2, %s28
        %v373 = vld [vmem:[%s2] sm:$0xff]
        %v374 = vld [vmem:[%s2 + $0x8] sm:$0xff]
        %v375 = vld [vmem:[%s2 + $0x10] sm:$0xff]
        %v376 = vld [vmem:[%s2 + $0x18] sm:$0xff]
        %v377 = vld [vmem:[%s5] sm:$0xff]
        %v378 = vld [vmem:[%s5 + $0x8] sm:$0xff]
        %v379 = vld [vmem:[%s5 + $0x10] sm:$0xff]
        %v380 = vld [vmem:[%s5 + $0x18] sm:$0xff]
        %v381 = vld [vmem:[%s5 + $0x20] sm:$0xff]
        %v382 = vld [vmem:[%s5 + $0x28] sm:$0xff]
        %v383 = vld [vmem:[%s5 + $0x30] sm:$0xff]
        %v384 = vld [vmem:[%s5 + $0x38] sm:$0xff]
        %v385 = vld [vmem:[%s6] sm:$0xff]
        %v386 = vld [vmem:[%s6 + $0x8] sm:$0xff]
        %v387 = vld [vmem:[%s6 + $0x10] sm:$0xff]
        %v388 = vld [vmem:[%s6 + $0x18] sm:$0xff]
        %v389 = vld [vmem:[%s6 + $0x20] sm:$0xff]
        %v390 = vld [vmem:[%s6 + $0x28] sm:$0xff]
        %v391 = vld [vmem:[%s6 + $0x30] sm:$0xff]
        %v392 = vld [vmem:[%s6 + $0x38] sm:$0xff]
        %v393 = vld [vmem:[%s3] sm:$0xff]
        %v394 = vld [vmem:[%s3 + $0x8] sm:$0xff]
        %v395 = vld [vmem:[%s4] sm:$0xff]
        %v396 = vld [vmem:[%s4 + $0x8] sm:$0xff]
        %v397 = vld [vmem:[%s7] sm:$0xff]
        %v398 = vld [vmem:[%s7 + $0x8] sm:$0xff]
        %v399 = vld [vmem:[%s7 + $0x10] sm:$0xff]
        %v400 = vld [vmem:[%s7 + $0x18] sm:$0xff]
        %v401 = vld [vmem:[%s7 + $0x20] sm:$0xff]
        %v402 = vld [vmem:[%s7 + $0x28] sm:$0xff]
        %v403 = vld [vmem:[%s7 + $0x30] sm:$0xff]
        %v404 = vld [vmem:[%s7 + $0x38] sm:$0xff]
        %v405 = vld [vmem:[%s321] sm:$0xff]
        %v406 = vld [vmem:[%s321 + $0x8] sm:$0xff]
        %v407 = vld [vmem:[%s321 + $0x10] sm:$0xff]
        %v408 = vld [vmem:[%s321 + $0x18] sm:$0xff]
        %v409 = vld [vmem:[%s321 + $0x20] sm:$0xff]
        %v410 = vld [vmem:[%s321 + $0x28] sm:$0xff]
        %v411 = vld [vmem:[%s321 + $0x30] sm:$0xff]
        %v412 = vld [vmem:[%s321 + $0x38] sm:$0xff]
        %v413 = vld [vmem:[%s321 + $0x40] sm:$0xff]
        %v414 = vld [vmem:[%s321 + $0x48] sm:$0xff]
        %v415 = vld [vmem:[%s321 + $0x50] sm:$0xff]
        %v416 = vld [vmem:[%s321 + $0x58] sm:$0xff]
        %v417 = vld [vmem:[%s321 + $0x60] sm:$0xff]
        %v418 = vld [vmem:[%s321 + $0x68] sm:$0xff]
        %v419 = vld [vmem:[%s321 + $0x70] sm:$0xff]
        %v420 = vld [vmem:[%s321 + $0x78] sm:$0xff]
        %v421 = vld [vmem:[%s331] sm:$0xff]
        %v422 = vld [vmem:[%s331 + $0x8] sm:$0xff]
        %v423 = vld [vmem:[%s331 + $0x10] sm:$0xff]
        %v424 = vld [vmem:[%s331 + $0x18] sm:$0xff]
        %v425 = vld [vmem:[%s331 + $0x20] sm:$0xff]
        %v426 = vld [vmem:[%s331 + $0x28] sm:$0xff]
        %v427 = vld [vmem:[%s331 + $0x30] sm:$0xff]
        %v428 = vld [vmem:[%s331 + $0x38] sm:$0xff]
        %v429 = vld [vmem:[%s331 + $0x40] sm:$0xff]
        %v430 = vld [vmem:[%s331 + $0x48] sm:$0xff]
        %v431 = vld [vmem:[%s331 + $0x50] sm:$0xff]
        %v432 = vld [vmem:[%s331 + $0x58] sm:$0xff]
        %v433 = vld [vmem:[%s331 + $0x60] sm:$0xff]
        %v434 = vld [vmem:[%s331 + $0x68] sm:$0xff]
        %v435 = vld [vmem:[%s331 + $0x70] sm:$0xff]
        %v436 = vld [vmem:[%s331 + $0x78] sm:$0xff]
        %v437 = vadd.f32 %v405, %v421
        %v438 = vadd.f32 %v406, %v422
        %v439 = vadd.f32 %v407, %v423
        %v440 = vadd.f32 %v408, %v424
        %v441 = vadd.f32 %v409, %v425
        %v442 = vadd.f32 %v410, %v426
        %v443 = vadd.f32 %v411, %v427
        %v444 = vadd.f32 %v412, %v428
        %v445 = vadd.f32 %v413, %v429
        %v446 = vadd.f32 %v414, %v430
        %v447 = vadd.f32 %v415, %v431
        %v448 = vadd.f32 %v416, %v432
        %v449 = vadd.f32 %v417, %v433
        %v450 = vadd.f32 %v418, %v434
        %v451 = vadd.f32 %v419, %v435
        %v452 = vadd.f32 %v420, %v436
        %vm453 = vcmask 523264
        %v455 = vsel %vm453, %v373, 0
        %v458 = vsel %vm453, %v374, 0
        %v461 = vsel %vm453, %v375, 0
        %v464 = vsel %vm453, %v376, 0
        %466 = vmatpush.msra.mxu0 0.0
        %467 = vmatpush.msra.mxu0 0.0
        %468 = vmatpush.msra.mxu0 0.0
        %469 = vmatpush.msra.mxu0 0.0
        %470 = vmatpush.msra.mxu0 0.0
        %471 = vmatpush.msra.mxu0 0.0
        %472 = vmatpush.msra.mxu0 0.0
        %473 = vmatpush.msra.mxu0 0.0
        %474 = vmatpush.msra.mxu0 %v451
        %475 = vmatpush.msra.mxu0 %v449
        %476 = vmatpush.msra.mxu0 %v447
        %477 = vmatpush.msra.mxu0 %v445
        %478 = vmatpush.msra.mxu0 %v443
        %479 = vmatpush.msra.mxu0 %v441
        %480 = vmatpush.msra.mxu0 %v439
        %481 = vmatpush.msra.mxu0 %v437
        %482 = vmatmul.f32.gmra.mxu0 %v455
        %v483 = vpop.f32.mrf.mxu0
        %v484 = vadd.f32 0.0, %v483
        %485 = vmatmul.f32.gmra.mxu0 %v458
        %v486 = vpop.f32.mrf.mxu0
        %v487 = vadd.f32 0.0, %v486
        %488 = vmatmul.f32.gmra.mxu0 %v461
        %v489 = vpop.f32.mrf.mxu0
        %v490 = vadd.f32 0.0, %v489
        %491 = vmatmul.f32.gmra.mxu0 %v464
        %v492 = vpop.f32.mrf.mxu0
        %v493 = vadd.f32 0.0, %v492
        %494 = vdwg.mxu0
        %495 = vmatpush.msra.mxu0 0.0
        %496 = vmatpush.msra.mxu0 0.0
        %497 = vmatpush.msra.mxu0 0.0
        %498 = vmatpush.msra.mxu0 0.0
        %499 = vmatpush.msra.mxu0 0.0
        %500 = vmatpush.msra.mxu0 0.0
        %501 = vmatpush.msra.mxu0 0.0
        %502 = vmatpush.msra.mxu0 0.0
        %503 = vmatpush.msra.mxu0 %v452
        %504 = vmatpush.msra.mxu0 %v450
        %505 = vmatpush.msra.mxu0 %v448
        %506 = vmatpush.msra.mxu0 %v446
        %507 = vmatpush.msra.mxu0 %v444
        %508 = vmatpush.msra.mxu0 %v442
        %509 = vmatpush.msra.mxu0 %v440
        %510 = vmatpush.msra.mxu0 %v438
        %511 = vmatmul.f32.gmra.mxu0 %v455
        %v512 = vpop.f32.mrf.mxu0
        %v513 = vadd.f32 0.0, %v512
        %514 = vmatmul.f32.gmra.mxu0 %v458
        %v515 = vpop.f32.mrf.mxu0
        %v516 = vadd.f32 0.0, %v515
        %517 = vmatmul.f32.gmra.mxu0 %v461
        %v518 = vpop.f32.mrf.mxu0
        %v519 = vadd.f32 0.0, %v518
        %520 = vmatmul.f32.gmra.mxu0 %v464
        %v521 = vpop.f32.mrf.mxu0
        %v522 = vadd.f32 0.0, %v521
        %523 = vdwg.mxu0
        %525 = vset.pattern.permute.xlu0 0
        %526 = vperm.xlu0 %525, %v393
        %v527 = vpop.permute.xlu0 %526
        %530 = vset.pattern.permute.xlu0 0
        %531 = vperm.xlu0 %530, %v394
        %v532 = vpop.permute.xlu0 %531
        %v534 = vadd.f32 %v484, %v527
        %v535 = vadd.f32 %v513, %v527
        %v536 = vadd.f32 %v487, %v532
        %v537 = vadd.f32 %v516, %v532
        %v538 = vmax.f32 %v534, 0.0
        %v539 = vmax.f32 %v535, 0.0
        %v540 = vmax.f32 %v536, 0.0
        %v541 = vmax.f32 %v537, 0.0
        %v542 = vadd.f32 %v490, %v519
        %543 = vadd.xlane.f32.xlu0 %v542
        %v544 = vpop.xlane.xlu0 %543
        %v545 = vadd.f32 %v493, %v522
        %546 = vadd.xlane.f32.xlu0 %v545
        %v547 = vpop.xlane.xlu0 %546
        %v548 = vmul.f32 %v544, 0.00390625
        %v549 = vmul.f32 %v547, 0.00390625
        %v550 = vadd.f32 %v548, %v395
        %v551 = vadd.f32 %v549, %v396
        %v552 = vmax.f32 %v550, 0.0
        %v553 = vmax.f32 %v551, 0.0
        %vm554 = vcmask 130048
        %v556 = vsel %vm554, %v385, 0
        %v559 = vsel %vm554, %v386, 0
        %v562 = vsel %vm554, %v387, 0
        %v565 = vsel %vm554, %v388, 0
        %v568 = vsel %vm554, %v389, 0
        %v571 = vsel %vm554, %v390, 0
        %v574 = vsel %vm554, %v391, 0
        %v577 = vsel %vm554, %v392, 0
        %579 = vmatpush.msra.mxu0 0.0
        %580 = vmatpush.msra.mxu0 0.0
        %581 = vmatpush.msra.mxu0 0.0
        %582 = vmatpush.msra.mxu0 0.0
        %583 = vmatpush.msra.mxu0 0.0
        %584 = vmatpush.msra.mxu0 0.0
        %585 = vmatpush.msra.mxu0 0.0
        %586 = vmatpush.msra.mxu0 0.0
        %587 = vmatpush.msra.mxu0 0.0
        %588 = vmatpush.msra.mxu0 0.0
        %589 = vmatpush.msra.mxu0 0.0
        %590 = vmatpush.msra.mxu0 0.0
        %591 = vmatpush.msra.mxu0 0.0
        %592 = vmatpush.msra.mxu0 0.0
        %593 = vmatpush.msra.mxu0 %v553
        %594 = vmatpush.msra.mxu0 %v552
        %595 = vmatmul.f32.gmra.mxu0 %v556
        %v596 = vpop.f32.mrf.mxu0
        %v597 = vadd.f32 %v397, %v596
        %598 = vmatmul.f32.gmra.mxu0 %v559
        %v599 = vpop.f32.mrf.mxu0
        %v600 = vadd.f32 %v398, %v599
        %601 = vmatmul.f32.gmra.mxu0 %v562
        %v602 = vpop.f32.mrf.mxu0
        %v603 = vadd.f32 %v399, %v602
        %604 = vmatmul.f32.gmra.mxu0 %v565
        %v605 = vpop.f32.mrf.mxu0
        %v606 = vadd.f32 %v400, %v605
        %607 = vmatmul.f32.gmra.mxu0 %v568
        %v608 = vpop.f32.mrf.mxu0
        %v609 = vadd.f32 %v401, %v608
        %610 = vmatmul.f32.gmra.mxu0 %v571
        %v611 = vpop.f32.mrf.mxu0
        %v612 = vadd.f32 %v402, %v611
        %613 = vmatmul.f32.gmra.mxu0 %v574
        %v614 = vpop.f32.mrf.mxu0
        %v615 = vadd.f32 %v403, %v614
        %616 = vmatmul.f32.gmra.mxu0 %v577
        %v617 = vpop.f32.mrf.mxu0
        %v618 = vadd.f32 %v404, %v617
        %619 = vdwg.mxu0
        %621 = vset.pattern.permute.xlu0 0
        %622 = vperm.xlu0 %621, %v597
        %v623 = vpop.permute.xlu0 %622
        %626 = vset.pattern.permute.xlu0 0
        %627 = vperm.xlu0 %626, %v600
        %v628 = vpop.permute.xlu0 %627
        %631 = vset.pattern.permute.xlu0 0
        %632 = vperm.xlu0 %631, %v603
        %v633 = vpop.permute.xlu0 %632
        %636 = vset.pattern.permute.xlu0 0
        %637 = vperm.xlu0 %636, %v606
        %v638 = vpop.permute.xlu0 %637
        %641 = vset.pattern.permute.xlu0 0
        %642 = vperm.xlu0 %641, %v609
        %v643 = vpop.permute.xlu0 %642
        %646 = vset.pattern.permute.xlu0 0
        %647 = vperm.xlu0 %646, %v612
        %v648 = vpop.permute.xlu0 %647
        %651 = vset.pattern.permute.xlu0 0
        %652 = vperm.xlu0 %651, %v615
        %v653 = vpop.permute.xlu0 %652
        %656 = vset.pattern.permute.xlu0 0
        %657 = vperm.xlu0 %656, %v618
        %v658 = vpop.permute.xlu0 %657
        %v661 = vsel %vm554, %v377, 0
        %v664 = vsel %vm554, %v378, 0
        %v667 = vsel %vm554, %v379, 0
        %v670 = vsel %vm554, %v380, 0
        %v673 = vsel %vm554, %v381, 0
        %v676 = vsel %vm554, %v382, 0
        %v679 = vsel %vm554, %v383, 0
        %v682 = vsel %vm554, %v384, 0
        %684 = vmatpush.msra.mxu0 0.0
        %685 = vmatpush.msra.mxu0 0.0
        %686 = vmatpush.msra.mxu0 0.0
        %687 = vmatpush.msra.mxu0 0.0
        %688 = vmatpush.msra.mxu0 0.0
        %689 = vmatpush.msra.mxu0 0.0
        %690 = vmatpush.msra.mxu0 0.0
        %691 = vmatpush.msra.mxu0 0.0
        %692 = vmatpush.msra.mxu0 0.0
        %693 = vmatpush.msra.mxu0 0.0
        %694 = vmatpush.msra.mxu0 0.0
        %695 = vmatpush.msra.mxu0 0.0
        %696 = vmatpush.msra.mxu0 0.0
        %697 = vmatpush.msra.mxu0 0.0
        %698 = vmatpush.msra.mxu0 %v540
        %699 = vmatpush.msra.mxu0 %v538
        %700 = vmatmul.f32.gmra.mxu0 %v661
        %v701 = vpop.f32.mrf.mxu0
        %v702 = vadd.f32 %v623, %v701
        %703 = vmatmul.f32.gmra.mxu0 %v664
        %v704 = vpop.f32.mrf.mxu0
        %v705 = vadd.f32 %v628, %v704
        %706 = vmatmul.f32.gmra.mxu0 %v667
        %v707 = vpop.f32.mrf.mxu0
        %v708 = vadd.f32 %v633, %v707
        %709 = vmatmul.f32.gmra.mxu0 %v670
        %v710 = vpop.f32.mrf.mxu0
        %v711 = vadd.f32 %v638, %v710
        %712 = vmatmul.f32.gmra.mxu0 %v673
        %v713 = vpop.f32.mrf.mxu0
        %v714 = vadd.f32 %v643, %v713
        %715 = vmatmul.f32.gmra.mxu0 %v676
        %v716 = vpop.f32.mrf.mxu0
        %v717 = vadd.f32 %v648, %v716
        %718 = vmatmul.f32.gmra.mxu0 %v679
        %v719 = vpop.f32.mrf.mxu0
        %v720 = vadd.f32 %v653, %v719
        %721 = vmatmul.f32.gmra.mxu0 %v682
        %v722 = vpop.f32.mrf.mxu0
        %v723 = vadd.f32 %v658, %v722
        %724 = vdwg.mxu0
        %725 = vmatpush.msra.mxu0 0.0
        %726 = vmatpush.msra.mxu0 0.0
        %727 = vmatpush.msra.mxu0 0.0
        %728 = vmatpush.msra.mxu0 0.0
        %729 = vmatpush.msra.mxu0 0.0
        %730 = vmatpush.msra.mxu0 0.0
        %731 = vmatpush.msra.mxu0 0.0
        %732 = vmatpush.msra.mxu0 0.0
        %733 = vmatpush.msra.mxu0 0.0
        %734 = vmatpush.msra.mxu0 0.0
        %735 = vmatpush.msra.mxu0 0.0
        %736 = vmatpush.msra.mxu0 0.0
        %737 = vmatpush.msra.mxu0 0.0
        %738 = vmatpush.msra.mxu0 0.0
        %739 = vmatpush.msra.mxu0 %v541
        %740 = vmatpush.msra.mxu0 %v539
        %741 = vmatmul.f32.gmra.mxu0 %v661
        %v742 = vpop.f32.mrf.mxu0
        %v743 = vadd.f32 %v623, %v742
        %744 = vmatmul.f32.gmra.mxu0 %v664
        %v745 = vpop.f32.mrf.mxu0
        %v746 = vadd.f32 %v628, %v745
        %747 = vmatmul.f32.gmra.mxu0 %v667
        %v748 = vpop.f32.mrf.mxu0
        %v749 = vadd.f32 %v633, %v748
        %750 = vmatmul.f32.gmra.mxu0 %v670
        %v751 = vpop.f32.mrf.mxu0
        %v752 = vadd.f32 %v638, %v751
        %753 = vmatmul.f32.gmra.mxu0 %v673
        %v754 = vpop.f32.mrf.mxu0
        %v755 = vadd.f32 %v643, %v754
        %756 = vmatmul.f32.gmra.mxu0 %v676
        %v757 = vpop.f32.mrf.mxu0
        %v758 = vadd.f32 %v648, %v757
        %759 = vmatmul.f32.gmra.mxu0 %v679
        %v760 = vpop.f32.mrf.mxu0
        %v761 = vadd.f32 %v653, %v760
        %762 = vmatmul.f32.gmra.mxu0 %v682
        %v763 = vpop.f32.mrf.mxu0
        %v764 = vadd.f32 %v658, %v763
        %765 = vdwg.mxu0
        %v766 = vxor.u32 %v702, 2147483648
        %v767 = vxor.u32 %v743, 2147483648
        %v768 = vxor.u32 %v705, 2147483648
        %v769 = vxor.u32 %v746, 2147483648
        %v770 = vxor.u32 %v708, 2147483648
        %v771 = vxor.u32 %v749, 2147483648
        %v772 = vxor.u32 %v711, 2147483648
        %v773 = vxor.u32 %v752, 2147483648
        %v774 = vxor.u32 %v714, 2147483648
        %v775 = vxor.u32 %v755, 2147483648
        %v776 = vxor.u32 %v717, 2147483648
        %v777 = vxor.u32 %v758, 2147483648
        %v778 = vxor.u32 %v720, 2147483648
        %v779 = vxor.u32 %v761, 2147483648
        %v780 = vxor.u32 %v723, 2147483648
        %v781 = vxor.u32 %v764, 2147483648
        %v782 = vmul.f32 %v766, 1.442695
        %v783 = vpow.pop %v782
        %v784 = vmul.f32 %v767, 1.442695
        %v785 = vpow.pop %v784
        %v786 = vmul.f32 %v768, 1.442695
        %v787 = vpow.pop %v786
        %v788 = vmul.f32 %v769, 1.442695
        %v789 = vpow.pop %v788
        %v790 = vmul.f32 %v770, 1.442695
        %v791 = vpow.pop %v790
        %v792 = vmul.f32 %v771, 1.442695
        %v793 = vpow.pop %v792
        %v794 = vmul.f32 %v772, 1.442695
        %v795 = vpow.pop %v794
        %v796 = vmul.f32 %v773, 1.442695
        %v797 = vpow.pop %v796
        %v798 = vmul.f32 %v774, 1.442695
        %v799 = vpow.pop %v798
        %v800 = vmul.f32 %v775, 1.442695
        %v801 = vpow.pop %v800
        %v802 = vmul.f32 %v776, 1.442695
        %v803 = vpow.pop %v802
        %v804 = vmul.f32 %v777, 1.442695
        %v805 = vpow.pop %v804
        %v806 = vmul.f32 %v778, 1.442695
        %v807 = vpow.pop %v806
        %v808 = vmul.f32 %v779, 1.442695
        %v809 = vpow.pop %v808
        %v810 = vmul.f32 %v780, 1.442695
        %v811 = vpow.pop %v810
        %v812 = vmul.f32 %v781, 1.442695
        %v813 = vpow.pop %v812
        %v814 = vadd.f32 %v783, 1.0
        %v815 = vadd.f32 %v785, 1.0
        %v816 = vadd.f32 %v787, 1.0
        %v817 = vadd.f32 %v789, 1.0
        %v818 = vadd.f32 %v791, 1.0
        %v819 = vadd.f32 %v793, 1.0
        %v820 = vadd.f32 %v795, 1.0
        %v821 = vadd.f32 %v797, 1.0
        %v822 = vadd.f32 %v799, 1.0
        %v823 = vadd.f32 %v801, 1.0
        %v824 = vadd.f32 %v803, 1.0
        %v825 = vadd.f32 %v805, 1.0
        %v826 = vadd.f32 %v807, 1.0
        %v827 = vadd.f32 %v809, 1.0
        %v828 = vadd.f32 %v811, 1.0
        %v829 = vadd.f32 %v813, 1.0
        %v830 = vrcp.pop %v814
        %v831 = vmul.f32 %v814, %v830
        %v832 = vsub.f32 1.0, %v831
        %v833 = vmul.f32 %v830, %v832
        %v834 = vadd.f32 %v830, %v833
        %vm835 = vweird.f32 %v814
        %vm836 = vweird.f32 %v830
        %vm837 = vmor %vm835, %vm836
        %v838 = vsel %vm837, %v830, %v834
        %v839 = vand.u32 2147483647, %v814
        %vm840 = vcmp.eq.f32.partialorder %v839, 8.507059e+37
        %v841 = vand.u32 %v814, 2147483648
        %v842 = vor.u32 1.1754944e-38, %v841
        %v843 = vsel %vm840, %v842, %v838
        %v844 = vmul.f32 1.0, %v843
        %v845 = vrcp.pop %v815
        %v846 = vmul.f32 %v815, %v845
        %v847 = vsub.f32 1.0, %v846
        %v848 = vmul.f32 %v845, %v847
        %v849 = vadd.f32 %v845, %v848
        %vm850 = vweird.f32 %v815
        %vm851 = vweird.f32 %v845
        %vm852 = vmor %vm850, %vm851
        %v853 = vsel %vm852, %v845, %v849
        %v854 = vand.u32 2147483647, %v815
        %vm855 = vcmp.eq.f32.partialorder %v854, 8.507059e+37
        %v856 = vand.u32 %v815, 2147483648
        %v857 = vor.u32 1.1754944e-38, %v856
        %v858 = vsel %vm855, %v857, %v853
        %v859 = vmul.f32 1.0, %v858
        %v860 = vrcp.pop %v816
        %v861 = vmul.f32 %v816, %v860
        %v862 = vsub.f32 1.0, %v861
        %v863 = vmul.f32 %v860, %v862
        %v864 = vadd.f32 %v860, %v863
        %vm865 = vweird.f32 %v816
        %vm866 = vweird.f32 %v860
        %vm867 = vmor %vm865, %vm866
        %v868 = vsel %vm867, %v860, %v864
        %v869 = vand.u32 2147483647, %v816
        %vm870 = vcmp.eq.f32.partialorder %v869, 8.507059e+37
        %v871 = vand.u32 %v816, 2147483648
        %v872 = vor.u32 1.1754944e-38, %v871
        %v873 = vsel %vm870, %v872, %v868
        %v874 = vmul.f32 1.0, %v873
        %v875 = vrcp.pop %v817
        %v876 = vmul.f32 %v817, %v875
        %v877 = vsub.f32 1.0, %v876
        %v878 = vmul.f32 %v875, %v877
        %v879 = vadd.f32 %v875, %v878
        %vm880 = vweird.f32 %v817
        %vm881 = vweird.f32 %v875
        %vm882 = vmor %vm880, %vm881
        %v883 = vsel %vm882, %v875, %v879
        %v884 = vand.u32 2147483647, %v817
        %vm885 = vcmp.eq.f32.partialorder %v884, 8.507059e+37
        %v886 = vand.u32 %v817, 2147483648
        %v887 = vor.u32 1.1754944e-38, %v886
        %v888 = vsel %vm885, %v887, %v883
        %v889 = vmul.f32 1.0, %v888
        %v890 = vrcp.pop %v818
        %v891 = vmul.f32 %v818, %v890
        %v892 = vsub.f32 1.0, %v891
        %v893 = vmul.f32 %v890, %v892
        %v894 = vadd.f32 %v890, %v893
        %vm895 = vweird.f32 %v818
        %vm896 = vweird.f32 %v890
        %vm897 = vmor %vm895, %vm896
        %v898 = vsel %vm897, %v890, %v894
        %v899 = vand.u32 2147483647, %v818
        %vm900 = vcmp.eq.f32.partialorder %v899, 8.507059e+37
        %v901 = vand.u32 %v818, 2147483648
        %v902 = vor.u32 1.1754944e-38, %v901
        %v903 = vsel %vm900, %v902, %v898
        %v904 = vmul.f32 1.0, %v903
        %v905 = vrcp.pop %v819
        %v906 = vmul.f32 %v819, %v905
        %v907 = vsub.f32 1.0, %v906
        %v908 = vmul.f32 %v905, %v907
        %v909 = vadd.f32 %v905, %v908
        %vm910 = vweird.f32 %v819
        %vm911 = vweird.f32 %v905
        %vm912 = vmor %vm910, %vm911
        %v913 = vsel %vm912, %v905, %v909
        %v914 = vand.u32 2147483647, %v819
        %vm915 = vcmp.eq.f32.partialorder %v914, 8.507059e+37
        %v916 = vand.u32 %v819, 2147483648
        %v917 = vor.u32 1.1754944e-38, %v916
        %v918 = vsel %vm915, %v917, %v913
        %v919 = vmul.f32 1.0, %v918
        %v920 = vrcp.pop %v820
        %v921 = vmul.f32 %v820, %v920
        %v922 = vsub.f32 1.0, %v921
        %v923 = vmul.f32 %v920, %v922
        %v924 = vadd.f32 %v920, %v923
        %vm925 = vweird.f32 %v820
        %vm926 = vweird.f32 %v920
        %vm927 = vmor %vm925, %vm926
        %v928 = vsel %vm927, %v920, %v924
        %v929 = vand.u32 2147483647, %v820
        %vm930 = vcmp.eq.f32.partialorder %v929, 8.507059e+37
        %v931 = vand.u32 %v820, 2147483648
        %v932 = vor.u32 1.1754944e-38, %v931
        %v933 = vsel %vm930, %v932, %v928
        %v934 = vmul.f32 1.0, %v933
        %v935 = vrcp.pop %v821
        %v936 = vmul.f32 %v821, %v935
        %v937 = vsub.f32 1.0, %v936
        %v938 = vmul.f32 %v935, %v937
        %v939 = vadd.f32 %v935, %v938
        %vm940 = vweird.f32 %v821
        %vm941 = vweird.f32 %v935
        %vm942 = vmor %vm940, %vm941
        %v943 = vsel %vm942, %v935, %v939
        %v944 = vand.u32 2147483647, %v821
        %vm945 = vcmp.eq.f32.partialorder %v944, 8.507059e+37
        %v946 = vand.u32 %v821, 2147483648
        %v947 = vor.u32 1.1754944e-38, %v946
        %v948 = vsel %vm945, %v947, %v943
        %v949 = vmul.f32 1.0, %v948
        %v950 = vrcp.pop %v822
        %v951 = vmul.f32 %v822, %v950
        %v952 = vsub.f32 1.0, %v951
        %v953 = vmul.f32 %v950, %v952
        %v954 = vadd.f32 %v950, %v953
        %vm955 = vweird.f32 %v822
        %vm956 = vweird.f32 %v950
        %vm957 = vmor %vm955, %vm956
        %v958 = vsel %vm957, %v950, %v954
        %v959 = vand.u32 2147483647, %v822
        %vm960 = vcmp.eq.f32.partialorder %v959, 8.507059e+37
        %v961 = vand.u32 %v822, 2147483648
        %v962 = vor.u32 1.1754944e-38, %v961
        %v963 = vsel %vm960, %v962, %v958
        %v964 = vmul.f32 1.0, %v963
        %v965 = vrcp.pop %v823
        %v966 = vmul.f32 %v823, %v965
        %v967 = vsub.f32 1.0, %v966
        %v968 = vmul.f32 %v965, %v967
        %v969 = vadd.f32 %v965, %v968
        %vm970 = vweird.f32 %v823
        %vm971 = vweird.f32 %v965
        %vm972 = vmor %vm970, %vm971
        %v973 = vsel %vm972, %v965, %v969
        %v974 = vand.u32 2147483647, %v823
        %vm975 = vcmp.eq.f32.partialorder %v974, 8.507059e+37
        %v976 = vand.u32 %v823, 2147483648
        %v977 = vor.u32 1.1754944e-38, %v976
        %v978 = vsel %vm975, %v977, %v973
        %v979 = vmul.f32 1.0, %v978
        %v980 = vrcp.pop %v824
        %v981 = vmul.f32 %v824, %v980
        %v982 = vsub.f32 1.0, %v981
        %v983 = vmul.f32 %v980, %v982
        %v984 = vadd.f32 %v980, %v983
        %vm985 = vweird.f32 %v824
        %vm986 = vweird.f32 %v980
        %vm987 = vmor %vm985, %vm986
        %v988 = vsel %vm987, %v980, %v984
        %v989 = vand.u32 2147483647, %v824
        %vm990 = vcmp.eq.f32.partialorder %v989, 8.507059e+37
        %v991 = vand.u32 %v824, 2147483648
        %v992 = vor.u32 1.1754944e-38, %v991
        %v993 = vsel %vm990, %v992, %v988
        %v994 = vmul.f32 1.0, %v993
        %v995 = vrcp.pop %v825
        %v996 = vmul.f32 %v825, %v995
        %v997 = vsub.f32 1.0, %v996
        %v998 = vmul.f32 %v995, %v997
        %v999 = vadd.f32 %v995, %v998
        %vm1000 = vweird.f32 %v825
        %vm1001 = vweird.f32 %v995
        %vm1002 = vmor %vm1000, %vm1001
        %v1003 = vsel %vm1002, %v995, %v999
        %v1004 = vand.u32 2147483647, %v825
        %vm1005 = vcmp.eq.f32.partialorder %v1004, 8.507059e+37
        %v1006 = vand.u32 %v825, 2147483648
        %v1007 = vor.u32 1.1754944e-38, %v1006
        %v1008 = vsel %vm1005, %v1007, %v1003
        %v1009 = vmul.f32 1.0, %v1008
        %v1010 = vrcp.pop %v826
        %v1011 = vmul.f32 %v826, %v1010
        %v1012 = vsub.f32 1.0, %v1011
        %v1013 = vmul.f32 %v1010, %v1012
        %v1014 = vadd.f32 %v1010, %v1013
        %vm1015 = vweird.f32 %v826
        %vm1016 = vweird.f32 %v1010
        %vm1017 = vmor %vm1015, %vm1016
        %v1018 = vsel %vm1017, %v1010, %v1014
        %v1019 = vand.u32 2147483647, %v826
        %vm1020 = vcmp.eq.f32.partialorder %v1019, 8.507059e+37
        %v1021 = vand.u32 %v826, 2147483648
        %v1022 = vor.u32 1.1754944e-38, %v1021
        %v1023 = vsel %vm1020, %v1022, %v1018
        %v1024 = vmul.f32 1.0, %v1023
        %v1025 = vrcp.pop %v827
        %v1026 = vmul.f32 %v827, %v1025
        %v1027 = vsub.f32 1.0, %v1026
        %v1028 = vmul.f32 %v1025, %v1027
        %v1029 = vadd.f32 %v1025, %v1028
        %vm1030 = vweird.f32 %v827
        %vm1031 = vweird.f32 %v1025
        %vm1032 = vmor %vm1030, %vm1031
        %v1033 = vsel %vm1032, %v1025, %v1029
        %v1034 = vand.u32 2147483647, %v827
        %vm1035 = vcmp.eq.f32.partialorder %v1034, 8.507059e+37
        %v1036 = vand.u32 %v827, 2147483648
        %v1037 = vor.u32 1.1754944e-38, %v1036
        %v1038 = vsel %vm1035, %v1037, %v1033
        %v1039 = vmul.f32 1.0, %v1038
        %v1040 = vrcp.pop %v828
        %v1041 = vmul.f32 %v828, %v1040
        %v1042 = vsub.f32 1.0, %v1041
        %v1043 = vmul.f32 %v1040, %v1042
        %v1044 = vadd.f32 %v1040, %v1043
        %vm1045 = vweird.f32 %v828
        %vm1046 = vweird.f32 %v1040
        %vm1047 = vmor %vm1045, %vm1046
        %v1048 = vsel %vm1047, %v1040, %v1044
        %v1049 = vand.u32 2147483647, %v828
        %vm1050 = vcmp.eq.f32.partialorder %v1049, 8.507059e+37
        %v1051 = vand.u32 %v828, 2147483648
        %v1052 = vor.u32 1.1754944e-38, %v1051
        %v1053 = vsel %vm1050, %v1052, %v1048
        %v1054 = vmul.f32 1.0, %v1053
        %v1055 = vrcp.pop %v829
        %v1056 = vmul.f32 %v829, %v1055
        %v1057 = vsub.f32 1.0, %v1056
        %v1058 = vmul.f32 %v1055, %v1057
        %v1059 = vadd.f32 %v1055, %v1058
        %vm1060 = vweird.f32 %v829
        %vm1061 = vweird.f32 %v1055
        %vm1062 = vmor %vm1060, %vm1061
        %v1063 = vsel %vm1062, %v1055, %v1059
        %v1064 = vand.u32 2147483647, %v829
        %vm1065 = vcmp.eq.f32.partialorder %v1064, 8.507059e+37
        %v1066 = vand.u32 %v829, 2147483648
        %v1067 = vor.u32 1.1754944e-38, %v1066
        %v1068 = vsel %vm1065, %v1067, %v1063
        %v1069 = vmul.f32 1.0, %v1068
        %v1070 = vsub.f32 %v405, %v421
        %v1071 = vsub.f32 %v406, %v422
        %v1072 = vsub.f32 %v407, %v423
        %v1073 = vsub.f32 %v408, %v424
        %v1074 = vsub.f32 %v409, %v425
        %v1075 = vsub.f32 %v410, %v426
        %v1076 = vsub.f32 %v411, %v427
        %v1077 = vsub.f32 %v412, %v428
        %v1078 = vsub.f32 %v413, %v429
        %v1079 = vsub.f32 %v414, %v430
        %v1080 = vsub.f32 %v415, %v431
        %v1081 = vsub.f32 %v416, %v432
        %v1082 = vsub.f32 %v417, %v433
        %v1083 = vsub.f32 %v418, %v434
        %v1084 = vsub.f32 %v419, %v435
        %v1085 = vsub.f32 %v420, %v436
        %v1086 = vmul.f32 %v844, %v1070
        %v1087 = vmul.f32 %v859, %v1071
        %v1088 = vmul.f32 %v874, %v1072
        %v1089 = vmul.f32 %v889, %v1073
        %v1090 = vmul.f32 %v904, %v1074
        %v1091 = vmul.f32 %v919, %v1075
        %v1092 = vmul.f32 %v934, %v1076
        %v1093 = vmul.f32 %v949, %v1077
        %v1094 = vmul.f32 %v964, %v1078
        %v1095 = vmul.f32 %v979, %v1079
        %v1096 = vmul.f32 %v994, %v1080
        %v1097 = vmul.f32 %v1009, %v1081
        %v1098 = vmul.f32 %v1024, %v1082
        %v1099 = vmul.f32 %v1039, %v1083
        %v1100 = vmul.f32 %v1054, %v1084
        %v1101 = vmul.f32 %v1069, %v1085
        %v1102 = vadd.f32 %v421, %v1086
        %v1103 = vadd.f32 %v422, %v1087
        %v1104 = vadd.f32 %v423, %v1088
        %v1105 = vadd.f32 %v424, %v1089
        %v1106 = vadd.f32 %v425, %v1090
        %v1107 = vadd.f32 %v426, %v1091
        %v1108 = vadd.f32 %v427, %v1092
        %v1109 = vadd.f32 %v428, %v1093
        %v1110 = vadd.f32 %v429, %v1094
        %v1111 = vadd.f32 %v430, %v1095
        %v1112 = vadd.f32 %v431, %v1096
        %v1113 = vadd.f32 %v432, %v1097
        %v1114 = vadd.f32 %v433, %v1098
        %v1115 = vadd.f32 %v434, %v1099
        %v1116 = vadd.f32 %v435, %v1100
        %v1117 = vadd.f32 %v436, %v1101
        %v1118 = vmul.f32 %v1102, 2.0
        %v1119 = vmul.f32 %v1103, 2.0
        %v1120 = vmul.f32 %v1104, 2.0
        %v1121 = vmul.f32 %v1105, 2.0
        %v1122 = vmul.f32 %v1106, 2.0
        %v1123 = vmul.f32 %v1107, 2.0
        %v1124 = vmul.f32 %v1108, 2.0
        %v1125 = vmul.f32 %v1109, 2.0
        %v1126 = vmul.f32 %v1110, 2.0
        %v1127 = vmul.f32 %v1111, 2.0
        %v1128 = vmul.f32 %v1112, 2.0
        %v1129 = vmul.f32 %v1113, 2.0
        %v1130 = vmul.f32 %v1114, 2.0
        %v1131 = vmul.f32 %v1115, 2.0
        %v1132 = vmul.f32 %v1116, 2.0
        %v1133 = vmul.f32 %v1117, 2.0
        %1134 = vst [vmem:[%s369] sm:$0xff] %v1118
        %1135 = vst [vmem:[%s369 + $0x8] sm:$0xff] %v1119
        %1136 = vst [vmem:[%s369 + $0x10] sm:$0xff] %v1120
        %1137 = vst [vmem:[%s369 + $0x18] sm:$0xff] %v1121
        %1138 = vst [vmem:[%s369 + $0x20] sm:$0xff] %v1122
        %1139 = vst [vmem:[%s369 + $0x28] sm:$0xff] %v1123
        %1140 = vst [vmem:[%s369 + $0x30] sm:$0xff] %v1124
        %1141 = vst [vmem:[%s369 + $0x38] sm:$0xff] %v1125
        %1142 = vst [vmem:[%s369 + $0x40] sm:$0xff] %v1126
        %1143 = vst [vmem:[%s369 + $0x48] sm:$0xff] %v1127
        %1144 = vst [vmem:[%s369 + $0x50] sm:$0xff] %v1128
        %1145 = vst [vmem:[%s369 + $0x58] sm:$0xff] %v1129
        %1146 = vst [vmem:[%s369 + $0x60] sm:$0xff] %v1130
        %1147 = vst [vmem:[%s369 + $0x68] sm:$0xff] %v1131
        %1148 = vst [vmem:[%s369 + $0x70] sm:$0xff] %v1132
        %1149 = vst [vmem:[%s369 + $0x78] sm:$0xff] %v1133
        %s1150 = scalar_lea.vmem %s321, 128 [#allocation2]
        %v1151 = vld [vmem:[%s1150] sm:$0xff]
        %v1152 = vld [vmem:[%s1150 + $0x8] sm:$0xff]
        %v1153 = vld [vmem:[%s1150 + $0x10] sm:$0xff]
        %v1154 = vld [vmem:[%s1150 + $0x18] sm:$0xff]
        %v1155 = vld [vmem:[%s1150 + $0x20] sm:$0xff]
        %v1156 = vld [vmem:[%s1150 + $0x28] sm:$0xff]
        %v1157 = vld [vmem:[%s1150 + $0x30] sm:$0xff]
        %v1158 = vld [vmem:[%s1150 + $0x38] sm:$0xff]
        %v1159 = vld [vmem:[%s1150 + $0x40] sm:$0xff]
        %v1160 = vld [vmem:[%s1150 + $0x48] sm:$0xff]
        %v1161 = vld [vmem:[%s1150 + $0x50] sm:$0xff]
        %v1162 = vld [vmem:[%s1150 + $0x58] sm:$0xff]
        %v1163 = vld [vmem:[%s1150 + $0x60] sm:$0xff]
        %v1164 = vld [vmem:[%s1150 + $0x68] sm:$0xff]
        %v1165 = vld [vmem:[%s1150 + $0x70] sm:$0xff]
        %v1166 = vld [vmem:[%s1150 + $0x78] sm:$0xff]
        %s1167 = scalar_lea.vmem %s331, 128 [#allocation5]
        %v1168 = vld [vmem:[%s1167] sm:$0xff]
        %v1169 = vld [vmem:[%s1167 + $0x8] sm:$0xff]
        %v1170 = vld [vmem:[%s1167 + $0x10] sm:$0xff]
        %v1171 = vld [vmem:[%s1167 + $0x18] sm:$0xff]
        %v1172 = vld [vmem:[%s1167 + $0x20] sm:$0xff]
        %v1173 = vld [vmem:[%s1167 + $0x28] sm:$0xff]
        %v1174 = vld [vmem:[%s1167 + $0x30] sm:$0xff]
        %v1175 = vld [vmem:[%s1167 + $0x38] sm:$0xff]
        %v1176 = vld [vmem:[%s1167 + $0x40] sm:$0xff]
        %v1177 = vld [vmem:[%s1167 + $0x48] sm:$0xff]
        %v1178 = vld [vmem:[%s1167 + $0x50] sm:$0xff]
        %v1179 = vld [vmem:[%s1167 + $0x58] sm:$0xff]
        %v1180 = vld [vmem:[%s1167 + $0x60] sm:$0xff]
        %v1181 = vld [vmem:[%s1167 + $0x68] sm:$0xff]
        %v1182 = vld [vmem:[%s1167 + $0x70] sm:$0xff]
        %v1183 = vld [vmem:[%s1167 + $0x78] sm:$0xff]
        %v1184 = vadd.f32 %v1151, %v1168
        %v1185 = vadd.f32 %v1152, %v1169
        %v1186 = vadd.f32 %v1153, %v1170
        %v1187 = vadd.f32 %v1154, %v1171
        %v1188 = vadd.f32 %v1155, %v1172
        %v1189 = vadd.f32 %v1156, %v1173
        %v1190 = vadd.f32 %v1157, %v1174
        %v1191 = vadd.f32 %v1158, %v1175
        %v1192 = vadd.f32 %v1159, %v1176
        %v1193 = vadd.f32 %v1160, %v1177
        %v1194 = vadd.f32 %v1161, %v1178
        %v1195 = vadd.f32 %v1162, %v1179
        %v1196 = vadd.f32 %v1163, %v1180
        %v1197 = vadd.f32 %v1164, %v1181
        %v1198 = vadd.f32 %v1165, %v1182
        %v1199 = vadd.f32 %v1166, %v1183
        %1200 = vmatpush.msra.mxu0 0.0
        %1201 = vmatpush.msra.mxu0 0.0
        %1202 = vmatpush.msra.mxu0 0.0
        %1203 = vmatpush.msra.mxu0 0.0
        %1204 = vmatpush.msra.mxu0 0.0
        %1205 = vmatpush.msra.mxu0 0.0
        %1206 = vmatpush.msra.mxu0 0.0
        %1207 = vmatpush.msra.mxu0 0.0
        %1208 = vmatpush.msra.mxu0 %v1198
        %1209 = vmatpush.msra.mxu0 %v1196
        %1210 = vmatpush.msra.mxu0 %v1194
        %1211 = vmatpush.msra.mxu0 %v1192
        %1212 = vmatpush.msra.mxu0 %v1190
        %1213 = vmatpush.msra.mxu0 %v1188
        %1214 = vmatpush.msra.mxu0 %v1186
        %1215 = vmatpush.msra.mxu0 %v1184
        %1216 = vmatmul.f32.gmra.mxu0 %v455
        %v1217 = vpop.f32.mrf.mxu0
        %v1218 = vadd.f32 0.0, %v1217
        %1219 = vmatmul.f32.gmra.mxu0 %v458
        %v1220 = vpop.f32.mrf.mxu0
        %v1221 = vadd.f32 0.0, %v1220
        %1222 = vmatmul.f32.gmra.mxu0 %v461
        %v1223 = vpop.f32.mrf.mxu0
        %v1224 = vadd.f32 0.0, %v1223
        %1225 = vmatmul.f32.gmra.mxu0 %v464
        %v1226 = vpop.f32.mrf.mxu0
        %v1227 = vadd.f32 0.0, %v1226
        %1228 = vdwg.mxu0
        %1229 = vmatpush.msra.mxu0 0.0
        %1230 = vmatpush.msra.mxu0 0.0
        %1231 = vmatpush.msra.mxu0 0.0
        %1232 = vmatpush.msra.mxu0 0.0
        %1233 = vmatpush.msra.mxu0 0.0
        %1234 = vmatpush.msra.mxu0 0.0
        %1235 = vmatpush.msra.mxu0 0.0
        %1236 = vmatpush.msra.mxu0 0.0
        %1237 = vmatpush.msra.mxu0 %v1199
        %1238 = vmatpush.msra.mxu0 %v1197
        %1239 = vmatpush.msra.mxu0 %v1195
        %1240 = vmatpush.msra.mxu0 %v1193
        %1241 = vmatpush.msra.mxu0 %v1191
        %1242 = vmatpush.msra.mxu0 %v1189
        %1243 = vmatpush.msra.mxu0 %v1187
        %1244 = vmatpush.msra.mxu0 %v1185
        %1245 = vmatmul.f32.gmra.mxu0 %v455
        %v1246 = vpop.f32.mrf.mxu0
        %v1247 = vadd.f32 0.0, %v1246
        %1248 = vmatmul.f32.gmra.mxu0 %v458
        %v1249 = vpop.f32.mrf.mxu0
        %v1250 = vadd.f32 0.0, %v1249
        %1251 = vmatmul.f32.gmra.mxu0 %v461
        %v1252 = vpop.f32.mrf.mxu0
        %v1253 = vadd.f32 0.0, %v1252
        %1254 = vmatmul.f32.gmra.mxu0 %v464
        %v1255 = vpop.f32.mrf.mxu0
        %v1256 = vadd.f32 0.0, %v1255
        %1257 = vdwg.mxu0
        %v1258 = vadd.f32 %v1218, %v527
        %v1259 = vadd.f32 %v1247, %v527
        %v1260 = vadd.f32 %v1221, %v532
        %v1261 = vadd.f32 %v1250, %v532
        %v1262 = vmax.f32 %v1258, 0.0
        %v1263 = vmax.f32 %v1259, 0.0
        %v1264 = vmax.f32 %v1260, 0.0
        %v1265 = vmax.f32 %v1261, 0.0
        %v1266 = vadd.f32 %v1224, %v1253
        %1267 = vadd.xlane.f32.xlu0 %v1266
        %v1268 = vpop.xlane.xlu0 %1267
        %v1269 = vadd.f32 %v1227, %v1256
        %1270 = vadd.xlane.f32.xlu0 %v1269
        %v1271 = vpop.xlane.xlu0 %1270
        %v1272 = vmul.f32 %v1268, 0.00390625
        %v1273 = vmul.f32 %v1271, 0.00390625
        %v1274 = vadd.f32 %v1272, %v395
        %v1275 = vadd.f32 %v1273, %v396
        %v1276 = vmax.f32 %v1274, 0.0
        %v1277 = vmax.f32 %v1275, 0.0
        %1278 = vmatpush.msra.mxu0 0.0
        %1279 = vmatpush.msra.mxu0 0.0
        %1280 = vmatpush.msra.mxu0 0.0
        %1281 = vmatpush.msra.mxu0 0.0
        %1282 = vmatpush.msra.mxu0 0.0
        %1283 = vmatpush.msra.mxu0 0.0
        %1284 = vmatpush.msra.mxu0 0.0
        %1285 = vmatpush.msra.mxu0 0.0
        %1286 = vmatpush.msra.mxu0 0.0
        %1287 = vmatpush.msra.mxu0 0.0
        %1288 = vmatpush.msra.mxu0 0.0
        %1289 = vmatpush.msra.mxu0 0.0
        %1290 = vmatpush.msra.mxu0 0.0
        %1291 = vmatpush.msra.mxu0 0.0
        %1292 = vmatpush.msra.mxu0 %v1277
        %1293 = vmatpush.msra.mxu0 %v1276
        %1294 = vmatmul.f32.gmra.mxu0 %v556
        %v1295 = vpop.f32.mrf.mxu0
        %v1296 = vadd.f32 %v397, %v1295
        %1297 = vmatmul.f32.gmra.mxu0 %v559
        %v1298 = vpop.f32.mrf.mxu0
        %v1299 = vadd.f32 %v398, %v1298
        %1300 = vmatmul.f32.gmra.mxu0 %v562
        %v1301 = vpop.f32.mrf.mxu0
        %v1302 = vadd.f32 %v399, %v1301
        %1303 = vmatmul.f32.gmra.mxu0 %v565
        %v1304 = vpop.f32.mrf.mxu0
        %v1305 = vadd.f32 %v400, %v1304
        %1306 = vmatmul.f32.gmra.mxu0 %v568
        %v1307 = vpop.f32.mrf.mxu0
        %v1308 = vadd.f32 %v401, %v1307
        %1309 = vmatmul.f32.gmra.mxu0 %v571
        %v1310 = vpop.f32.mrf.mxu0
        %v1311 = vadd.f32 %v402, %v1310
        %1312 = vmatmul.f32.gmra.mxu0 %v574
        %v1313 = vpop.f32.mrf.mxu0
        %v1314 = vadd.f32 %v403, %v1313
        %1315 = vmatmul.f32.gmra.mxu0 %v577
        %v1316 = vpop.f32.mrf.mxu0
        %v1317 = vadd.f32 %v404, %v1316
        %1318 = vdwg.mxu0
        %1320 = vset.pattern.permute.xlu0 0
        %1321 = vperm.xlu0 %1320, %v1296
        %v1322 = vpop.permute.xlu0 %1321
        %1325 = vset.pattern.permute.xlu0 0
        %1326 = vperm.xlu0 %1325, %v1299
        %v1327 = vpop.permute.xlu0 %1326
        %1330 = vset.pattern.permute.xlu0 0
        %1331 = vperm.xlu0 %1330, %v1302
        %v1332 = vpop.permute.xlu0 %1331
        %1335 = vset.pattern.permute.xlu0 0
        %1336 = vperm.xlu0 %1335, %v1305
        %v1337 = vpop.permute.xlu0 %1336
        %1340 = vset.pattern.permute.xlu0 0
        %1341 = vperm.xlu0 %1340, %v1308
        %v1342 = vpop.permute.xlu0 %1341
        %1345 = vset.pattern.permute.xlu0 0
        %1346 = vperm.xlu0 %1345, %v1311
        %v1347 = vpop.permute.xlu0 %1346
        %1350 = vset.pattern.permute.xlu0 0
        %1351 = vperm.xlu0 %1350, %v1314
        %v1352 = vpop.permute.xlu0 %1351
        %1355 = vset.pattern.permute.xlu0 0
        %1356 = vperm.xlu0 %1355, %v1317
        %v1357 = vpop.permute.xlu0 %1356
        %1359 = vmatpush.msra.mxu0 0.0
        %1360 = vmatpush.msra.mxu0 0.0
        %1361 = vmatpush.msra.mxu0 0.0
        %1362 = vmatpush.msra.mxu0 0.0
        %1363 = vmatpush.msra.mxu0 0.0
        %1364 = vmatpush.msra.mxu0 0.0
        %1365 = vmatpush.msra.mxu0 0.0
        %1366 = vmatpush.msra.mxu0 0.0
        %1367 = vmatpush.msra.mxu0 0.0
        %1368 = vmatpush.msra.mxu0 0.0
        %1369 = vmatpush.msra.mxu0 0.0
        %1370 = vmatpush.msra.mxu0 0.0
        %1371 = vmatpush.msra.mxu0 0.0
        %1372 = vmatpush.msra.mxu0 0.0
        %1373 = vmatpush.msra.mxu0 %v1264
        %1374 = vmatpush.msra.mxu0 %v1262
        %1375 = vmatmul.f32.gmra.mxu0 %v661
        %v1376 = vpop.f32.mrf.mxu0
        %v1377 = vadd.f32 %v1322, %v1376
        %1378 = vmatmul.f32.gmra.mxu0 %v664
        %v1379 = vpop.f32.mrf.mxu0
        %v1380 = vadd.f32 %v1327, %v1379
        %1381 = vmatmul.f32.gmra.mxu0 %v667
        %v1382 = vpop.f32.mrf.mxu0
        %v1383 = vadd.f32 %v1332, %v1382
        %1384 = vmatmul.f32.gmra.mxu0 %v670
        %v1385 = vpop.f32.mrf.mxu0
        %v1386 = vadd.f32 %v1337, %v1385
        %1387 = vmatmul.f32.gmra.mxu0 %v673
        %v1388 = vpop.f32.mrf.mxu0
        %v1389 = vadd.f32 %v1342, %v1388
        %1390 = vmatmul.f32.gmra.mxu0 %v676
        %v1391 = vpop.f32.mrf.mxu0
        %v1392 = vadd.f32 %v1347, %v1391
        %1393 = vmatmul.f32.gmra.mxu0 %v679
        %v1394 = vpop.f32.mrf.mxu0
        %v1395 = vadd.f32 %v1352, %v1394
        %1396 = vmatmul.f32.gmra.mxu0 %v682
        %v1397 = vpop.f32.mrf.mxu0
        %v1398 = vadd.f32 %v1357, %v1397
        %1399 = vdwg.mxu0
        %1400 = vmatpush.msra.mxu0 0.0
        %1401 = vmatpush.msra.mxu0 0.0
        %1402 = vmatpush.msra.mxu0 0.0
        %1403 = vmatpush.msra.mxu0 0.0
        %1404 = vmatpush.msra.mxu0 0.0
        %1405 = vmatpush.msra.mxu0 0.0
        %1406 = vmatpush.msra.mxu0 0.0
        %1407 = vmatpush.msra.mxu0 0.0
        %1408 = vmatpush.msra.mxu0 0.0
        %1409 = vmatpush.msra.mxu0 0.0
        %1410 = vmatpush.msra.mxu0 0.0
        %1411 = vmatpush.msra.mxu0 0.0
        %1412 = vmatpush.msra.mxu0 0.0
        %1413 = vmatpush.msra.mxu0 0.0
        %1414 = vmatpush.msra.mxu0 %v1265
        %1415 = vmatpush.msra.mxu0 %v1263
        %1416 = vmatmul.f32.gmra.mxu0 %v661
        %v1417 = vpop.f32.mrf.mxu0
        %v1418 = vadd.f32 %v1322, %v1417
        %1419 = vmatmul.f32.gmra.mxu0 %v664
        %v1420 = vpop.f32.mrf.mxu0
        %v1421 = vadd.f32 %v1327, %v1420
        %1422 = vmatmul.f32.gmra.mxu0 %v667
        %v1423 = vpop.f32.mrf.mxu0
        %v1424 = vadd.f32 %v1332, %v1423
        %1425 = vmatmul.f32.gmra.mxu0 %v670
        %v1426 = vpop.f32.mrf.mxu0
        %v1427 = vadd.f32 %v1337, %v1426
        %1428 = vmatmul.f32.gmra.mxu0 %v673
        %v1429 = vpop.f32.mrf.mxu0
        %v1430 = vadd.f32 %v1342, %v1429
        %1431 = vmatmul.f32.gmra.mxu0 %v676
        %v1432 = vpop.f32.mrf.mxu0
        %v1433 = vadd.f32 %v1347, %v1432
        %1434 = vmatmul.f32.gmra.mxu0 %v679
        %v1435 = vpop.f32.mrf.mxu0
        %v1436 = vadd.f32 %v1352, %v1435
        %1437 = vmatmul.f32.gmra.mxu0 %v682
        %v1438 = vpop.f32.mrf.mxu0
        %v1439 = vadd.f32 %v1357, %v1438
        %1440 = vdwg.mxu0
        %v1441 = vxor.u32 %v1377, 2147483648
        %v1442 = vxor.u32 %v1418, 2147483648
        %v1443 = vxor.u32 %v1380, 2147483648
        %v1444 = vxor.u32 %v1421, 2147483648
        %v1445 = vxor.u32 %v1383, 2147483648
        %v1446 = vxor.u32 %v1424, 2147483648
        %v1447 = vxor.u32 %v1386, 2147483648
        %v1448 = vxor.u32 %v1427, 2147483648
        %v1449 = vxor.u32 %v1389, 2147483648
        %v1450 = vxor.u32 %v1430, 2147483648
        %v1451 = vxor.u32 %v1392, 2147483648
        %v1452 = vxor.u32 %v1433, 2147483648
        %v1453 = vxor.u32 %v1395, 2147483648
        %v1454 = vxor.u32 %v1436, 2147483648
        %v1455 = vxor.u32 %v1398, 2147483648
        %v1456 = vxor.u32 %v1439, 2147483648
        %v1457 = vmul.f32 %v1441, 1.442695
        %v1458 = vpow.pop %v1457
        %v1459 = vmul.f32 %v1442, 1.442695
        %v1460 = vpow.pop %v1459
        %v1461 = vmul.f32 %v1443, 1.442695
        %v1462 = vpow.pop %v1461
        %v1463 = vmul.f32 %v1444, 1.442695
        %v1464 = vpow.pop %v1463
        %v1465 = vmul.f32 %v1445, 1.442695
        %v1466 = vpow.pop %v1465
        %v1467 = vmul.f32 %v1446, 1.442695
        %v1468 = vpow.pop %v1467
        %v1469 = vmul.f32 %v1447, 1.442695
        %v1470 = vpow.pop %v1469
        %v1471 = vmul.f32 %v1448, 1.442695
        %v1472 = vpow.pop %v1471
        %v1473 = vmul.f32 %v1449, 1.442695
        %v1474 = vpow.pop %v1473
        %v1475 = vmul.f32 %v1450, 1.442695
        %v1476 = vpow.pop %v1475
        %v1477 = vmul.f32 %v1451, 1.442695
        %v1478 = vpow.pop %v1477
        %v1479 = vmul.f32 %v1452, 1.442695
        %v1480 = vpow.pop %v1479
        %v1481 = vmul.f32 %v1453, 1.442695
        %v1482 = vpow.pop %v1481
        %v1483 = vmul.f32 %v1454, 1.442695
        %v1484 = vpow.pop %v1483
        %v1485 = vmul.f32 %v1455, 1.442695
        %v1486 = vpow.pop %v1485
        %v1487 = vmul.f32 %v1456, 1.442695
        %v1488 = vpow.pop %v1487
        %v1489 = vadd.f32 %v1458, 1.0
        %v1490 = vadd.f32 %v1460, 1.0
        %v1491 = vadd.f32 %v1462, 1.0
        %v1492 = vadd.f32 %v1464, 1.0
        %v1493 = vadd.f32 %v1466, 1.0
        %v1494 = vadd.f32 %v1468, 1.0
        %v1495 = vadd.f32 %v1470, 1.0
        %v1496 = vadd.f32 %v1472, 1.0
        %v1497 = vadd.f32 %v1474, 1.0
        %v1498 = vadd.f32 %v1476, 1.0
        %v1499 = vadd.f32 %v1478, 1.0
        %v1500 = vadd.f32 %v1480, 1.0
        %v1501 = vadd.f32 %v1482, 1.0
        %v1502 = vadd.f32 %v1484, 1.0
        %v1503 = vadd.f32 %v1486, 1.0
        %v1504 = vadd.f32 %v1488, 1.0
        %v1505 = vrcp.pop %v1489
        %v1506 = vmul.f32 %v1489, %v1505
        %v1507 = vsub.f32 1.0, %v1506
        %v1508 = vmul.f32 %v1505, %v1507
        %v1509 = vadd.f32 %v1505, %v1508
        %vm1510 = vweird.f32 %v1489
        %vm1511 = vweird.f32 %v1505
        %vm1512 = vmor %vm1510, %vm1511
        %v1513 = vsel %vm1512, %v1505, %v1509
        %v1514 = vand.u32 2147483647, %v1489
        %vm1515 = vcmp.eq.f32.partialorder %v1514, 8.507059e+37
        %v1516 = vand.u32 %v1489, 2147483648
        %v1517 = vor.u32 1.1754944e-38, %v1516
        %v1518 = vsel %vm1515, %v1517, %v1513
        %v1519 = vmul.f32 1.0, %v1518
        %v1520 = vrcp.pop %v1490
        %v1521 = vmul.f32 %v1490, %v1520
        %v1522 = vsub.f32 1.0, %v1521
        %v1523 = vmul.f32 %v1520, %v1522
        %v1524 = vadd.f32 %v1520, %v1523
        %vm1525 = vweird.f32 %v1490
        %vm1526 = vweird.f32 %v1520
        %vm1527 = vmor %vm1525, %vm1526
        %v1528 = vsel %vm1527, %v1520, %v1524
        %v1529 = vand.u32 2147483647, %v1490
        %vm1530 = vcmp.eq.f32.partialorder %v1529, 8.507059e+37
        %v1531 = vand.u32 %v1490, 2147483648
        %v1532 = vor.u32 1.1754944e-38, %v1531
        %v1533 = vsel %vm1530, %v1532, %v1528
        %v1534 = vmul.f32 1.0, %v1533
        %v1535 = vrcp.pop %v1491
        %v1536 = vmul.f32 %v1491, %v1535
        %v1537 = vsub.f32 1.0, %v1536
        %v1538 = vmul.f32 %v1535, %v1537
        %v1539 = vadd.f32 %v1535, %v1538
        %vm1540 = vweird.f32 %v1491
        %vm1541 = vweird.f32 %v1535
        %vm1542 = vmor %vm1540, %vm1541
        %v1543 = vsel %vm1542, %v1535, %v1539
        %v1544 = vand.u32 2147483647, %v1491
        %vm1545 = vcmp.eq.f32.partialorder %v1544, 8.507059e+37
        %v1546 = vand.u32 %v1491, 2147483648
        %v1547 = vor.u32 1.1754944e-38, %v1546
        %v1548 = vsel %vm1545, %v1547, %v1543
        %v1549 = vmul.f32 1.0, %v1548
        %v1550 = vrcp.pop %v1492
        %v1551 = vmul.f32 %v1492, %v1550
        %v1552 = vsub.f32 1.0, %v1551
        %v1553 = vmul.f32 %v1550, %v1552
        %v1554 = vadd.f32 %v1550, %v1553
        %vm1555 = vweird.f32 %v1492
        %vm1556 = vweird.f32 %v1550
        %vm1557 = vmor %vm1555, %vm1556
        %v1558 = vsel %vm1557, %v1550, %v1554
        %v1559 = vand.u32 2147483647, %v1492
        %vm1560 = vcmp.eq.f32.partialorder %v1559, 8.507059e+37
        %v1561 = vand.u32 %v1492, 2147483648
        %v1562 = vor.u32 1.1754944e-38, %v1561
        %v1563 = vsel %vm1560, %v1562, %v1558
        %v1564 = vmul.f32 1.0, %v1563
        %v1565 = vrcp.pop %v1493
        %v1566 = vmul.f32 %v1493, %v1565
        %v1567 = vsub.f32 1.0, %v1566
        %v1568 = vmul.f32 %v1565, %v1567
        %v1569 = vadd.f32 %v1565, %v1568
        %vm1570 = vweird.f32 %v1493
        %vm1571 = vweird.f32 %v1565
        %vm1572 = vmor %vm1570, %vm1571
        %v1573 = vsel %vm1572, %v1565, %v1569
        %v1574 = vand.u32 2147483647, %v1493
        %vm1575 = vcmp.eq.f32.partialorder %v1574, 8.507059e+37
        %v1576 = vand.u32 %v1493, 2147483648
        %v1577 = vor.u32 1.1754944e-38, %v1576
        %v1578 = vsel %vm1575, %v1577, %v1573
        %v1579 = vmul.f32 1.0, %v1578
        %v1580 = vrcp.pop %v1494
        %v1581 = vmul.f32 %v1494, %v1580
        %v1582 = vsub.f32 1.0, %v1581
        %v1583 = vmul.f32 %v1580, %v1582
        %v1584 = vadd.f32 %v1580, %v1583
        %vm1585 = vweird.f32 %v1494
        %vm1586 = vweird.f32 %v1580
        %vm1587 = vmor %vm1585, %vm1586
        %v1588 = vsel %vm1587, %v1580, %v1584
        %v1589 = vand.u32 2147483647, %v1494
        %vm1590 = vcmp.eq.f32.partialorder %v1589, 8.507059e+37
        %v1591 = vand.u32 %v1494, 2147483648
        %v1592 = vor.u32 1.1754944e-38, %v1591
        %v1593 = vsel %vm1590, %v1592, %v1588
        %v1594 = vmul.f32 1.0, %v1593
        %v1595 = vrcp.pop %v1495
        %v1596 = vmul.f32 %v1495, %v1595
        %v1597 = vsub.f32 1.0, %v1596
        %v1598 = vmul.f32 %v1595, %v1597
        %v1599 = vadd.f32 %v1595, %v1598
        %vm1600 = vweird.f32 %v1495
        %vm1601 = vweird.f32 %v1595
        %vm1602 = vmor %vm1600, %vm1601
        %v1603 = vsel %vm1602, %v1595, %v1599
        %v1604 = vand.u32 2147483647, %v1495
        %vm1605 = vcmp.eq.f32.partialorder %v1604, 8.507059e+37
        %v1606 = vand.u32 %v1495, 2147483648
        %v1607 = vor.u32 1.1754944e-38, %v1606
        %v1608 = vsel %vm1605, %v1607, %v1603
        %v1609 = vmul.f32 1.0, %v1608
        %v1610 = vrcp.pop %v1496
        %v1611 = vmul.f32 %v1496, %v1610
        %v1612 = vsub.f32 1.0, %v1611
        %v1613 = vmul.f32 %v1610, %v1612
        %v1614 = vadd.f32 %v1610, %v1613
        %vm1615 = vweird.f32 %v1496
        %vm1616 = vweird.f32 %v1610
        %vm1617 = vmor %vm1615, %vm1616
        %v1618 = vsel %vm1617, %v1610, %v1614
        %v1619 = vand.u32 2147483647, %v1496
        %vm1620 = vcmp.eq.f32.partialorder %v1619, 8.507059e+37
        %v1621 = vand.u32 %v1496, 2147483648
        %v1622 = vor.u32 1.1754944e-38, %v1621
        %v1623 = vsel %vm1620, %v1622, %v1618
        %v1624 = vmul.f32 1.0, %v1623
        %v1625 = vrcp.pop %v1497
        %v1626 = vmul.f32 %v1497, %v1625
        %v1627 = vsub.f32 1.0, %v1626
        %v1628 = vmul.f32 %v1625, %v1627
        %v1629 = vadd.f32 %v1625, %v1628
        %vm1630 = vweird.f32 %v1497
        %vm1631 = vweird.f32 %v1625
        %vm1632 = vmor %vm1630, %vm1631
        %v1633 = vsel %vm1632, %v1625, %v1629
        %v1634 = vand.u32 2147483647, %v1497
        %vm1635 = vcmp.eq.f32.partialorder %v1634, 8.507059e+37
        %v1636 = vand.u32 %v1497, 2147483648
        %v1637 = vor.u32 1.1754944e-38, %v1636
        %v1638 = vsel %vm1635, %v1637, %v1633
        %v1639 = vmul.f32 1.0, %v1638
        %v1640 = vrcp.pop %v1498
        %v1641 = vmul.f32 %v1498, %v1640
        %v1642 = vsub.f32 1.0, %v1641
        %v1643 = vmul.f32 %v1640, %v1642
        %v1644 = vadd.f32 %v1640, %v1643
        %vm1645 = vweird.f32 %v1498
        %vm1646 = vweird.f32 %v1640
        %vm1647 = vmor %vm1645, %vm1646
        %v1648 = vsel %vm1647, %v1640, %v1644
        %v1649 = vand.u32 2147483647, %v1498
        %vm1650 = vcmp.eq.f32.partialorder %v1649, 8.507059e+37
        %v1651 = vand.u32 %v1498, 2147483648
        %v1652 = vor.u32 1.1754944e-38, %v1651
        %v1653 = vsel %vm1650, %v1652, %v1648
        %v1654 = vmul.f32 1.0, %v1653
        %v1655 = vrcp.pop %v1499
        %v1656 = vmul.f32 %v1499, %v1655
        %v1657 = vsub.f32 1.0, %v1656
        %v1658 = vmul.f32 %v1655, %v1657
        %v1659 = vadd.f32 %v1655, %v1658
        %vm1660 = vweird.f32 %v1499
        %vm1661 = vweird.f32 %v1655
        %vm1662 = vmor %vm1660, %vm1661
        %v1663 = vsel %vm1662, %v1655, %v1659
        %v1664 = vand.u32 2147483647, %v1499
        %vm1665 = vcmp.eq.f32.partialorder %v1664, 8.507059e+37
        %v1666 = vand.u32 %v1499, 2147483648
        %v1667 = vor.u32 1.1754944e-38, %v1666
        %v1668 = vsel %vm1665, %v1667, %v1663
        %v1669 = vmul.f32 1.0, %v1668
        %v1670 = vrcp.pop %v1500
        %v1671 = vmul.f32 %v1500, %v1670
        %v1672 = vsub.f32 1.0, %v1671
        %v1673 = vmul.f32 %v1670, %v1672
        %v1674 = vadd.f32 %v1670, %v1673
        %vm1675 = vweird.f32 %v1500
        %vm1676 = vweird.f32 %v1670
        %vm1677 = vmor %vm1675, %vm1676
        %v1678 = vsel %vm1677, %v1670, %v1674
        %v1679 = vand.u32 2147483647, %v1500
        %vm1680 = vcmp.eq.f32.partialorder %v1679, 8.507059e+37
        %v1681 = vand.u32 %v1500, 2147483648
        %v1682 = vor.u32 1.1754944e-38, %v1681
        %v1683 = vsel %vm1680, %v1682, %v1678
        %v1684 = vmul.f32 1.0, %v1683
        %v1685 = vrcp.pop %v1501
        %v1686 = vmul.f32 %v1501, %v1685
        %v1687 = vsub.f32 1.0, %v1686
        %v1688 = vmul.f32 %v1685, %v1687
        %v1689 = vadd.f32 %v1685, %v1688
        %vm1690 = vweird.f32 %v1501
        %vm1691 = vweird.f32 %v1685
        %vm1692 = vmor %vm1690, %vm1691
        %v1693 = vsel %vm1692, %v1685, %v1689
        %v1694 = vand.u32 2147483647, %v1501
        %vm1695 = vcmp.eq.f32.partialorder %v1694, 8.507059e+37
        %v1696 = vand.u32 %v1501, 2147483648
        %v1697 = vor.u32 1.1754944e-38, %v1696
        %v1698 = vsel %vm1695, %v1697, %v1693
        %v1699 = vmul.f32 1.0, %v1698
        %v1700 = vrcp.pop %v1502
        %v1701 = vmul.f32 %v1502, %v1700
        %v1702 = vsub.f32 1.0, %v1701
        %v1703 = vmul.f32 %v1700, %v1702
        %v1704 = vadd.f32 %v1700, %v1703
        %vm1705 = vweird.f32 %v1502
        %vm1706 = vweird.f32 %v1700
        %vm1707 = vmor %vm1705, %vm1706
        %v1708 = vsel %vm1707, %v1700, %v1704
        %v1709 = vand.u32 2147483647, %v1502
        %vm1710 = vcmp.eq.f32.partialorder %v1709, 8.507059e+37
        %v1711 = vand.u32 %v1502, 2147483648
        %v1712 = vor.u32 1.1754944e-38, %v1711
        %v1713 = vsel %vm1710, %v1712, %v1708
        %v1714 = vmul.f32 1.0, %v1713
        %v1715 = vrcp.pop %v1503
        %v1716 = vmul.f32 %v1503, %v1715
        %v1717 = vsub.f32 1.0, %v1716
        %v1718 = vmul.f32 %v1715, %v1717
        %v1719 = vadd.f32 %v1715, %v1718
        %vm1720 = vweird.f32 %v1503
        %vm1721 = vweird.f32 %v1715
        %vm1722 = vmor %vm1720, %vm1721
        %v1723 = vsel %vm1722, %v1715, %v1719
        %v1724 = vand.u32 2147483647, %v1503
        %vm1725 = vcmp.eq.f32.partialorder %v1724, 8.507059e+37
        %v1726 = vand.u32 %v1503, 2147483648
        %v1727 = vor.u32 1.1754944e-38, %v1726
        %v1728 = vsel %vm1725, %v1727, %v1723
        %v1729 = vmul.f32 1.0, %v1728
        %v1730 = vrcp.pop %v1504
        %v1731 = vmul.f32 %v1504, %v1730
        %v1732 = vsub.f32 1.0, %v1731
        %v1733 = vmul.f32 %v1730, %v1732
        %v1734 = vadd.f32 %v1730, %v1733
        %vm1735 = vweird.f32 %v1504
        %vm1736 = vweird.f32 %v1730
        %vm1737 = vmor %vm1735, %vm1736
        %v1738 = vsel %vm1737, %v1730, %v1734
        %v1739 = vand.u32 2147483647, %v1504
        %vm1740 = vcmp.eq.f32.partialorder %v1739, 8.507059e+37
        %v1741 = vand.u32 %v1504, 2147483648
        %v1742 = vor.u32 1.1754944e-38, %v1741
        %v1743 = vsel %vm1740, %v1742, %v1738
        %v1744 = vmul.f32 1.0, %v1743
        %v1745 = vsub.f32 %v1151, %v1168
        %v1746 = vsub.f32 %v1152, %v1169
        %v1747 = vsub.f32 %v1153, %v1170
        %v1748 = vsub.f32 %v1154, %v1171
        %v1749 = vsub.f32 %v1155, %v1172
        %v1750 = vsub.f32 %v1156, %v1173
        %v1751 = vsub.f32 %v1157, %v1174
        %v1752 = vsub.f32 %v1158, %v1175
        %v1753 = vsub.f32 %v1159, %v1176
        %v1754 = vsub.f32 %v1160, %v1177
        %v1755 = vsub.f32 %v1161, %v1178
        %v1756 = vsub.f32 %v1162, %v1179
        %v1757 = vsub.f32 %v1163, %v1180
        %v1758 = vsub.f32 %v1164, %v1181
        %v1759 = vsub.f32 %v1165, %v1182
        %v1760 = vsub.f32 %v1166, %v1183
        %v1761 = vmul.f32 %v1519, %v1745
        %v1762 = vmul.f32 %v1534, %v1746
        %v1763 = vmul.f32 %v1549, %v1747
        %v1764 = vmul.f32 %v1564, %v1748
        %v1765 = vmul.f32 %v1579, %v1749
        %v1766 = vmul.f32 %v1594, %v1750
        %v1767 = vmul.f32 %v1609, %v1751
        %v1768 = vmul.f32 %v1624, %v1752
        %v1769 = vmul.f32 %v1639, %v1753
        %v1770 = vmul.f32 %v1654, %v1754
        %v1771 = vmul.f32 %v1669, %v1755
        %v1772 = vmul.f32 %v1684, %v1756
        %v1773 = vmul.f32 %v1699, %v1757
        %v1774 = vmul.f32 %v1714, %v1758
        %v1775 = vmul.f32 %v1729, %v1759
        %v1776 = vmul.f32 %v1744, %v1760
        %v1777 = vadd.f32 %v1168, %v1761
        %v1778 = vadd.f32 %v1169, %v1762
        %v1779 = vadd.f32 %v1170, %v1763
        %v1780 = vadd.f32 %v1171, %v1764
        %v1781 = vadd.f32 %v1172, %v1765
        %v1782 = vadd.f32 %v1173, %v1766
        %v1783 = vadd.f32 %v1174, %v1767
        %v1784 = vadd.f32 %v1175, %v1768
        %v1785 = vadd.f32 %v1176, %v1769
        %v1786 = vadd.f32 %v1177, %v1770
        %v1787 = vadd.f32 %v1178, %v1771
        %v1788 = vadd.f32 %v1179, %v1772
        %v1789 = vadd.f32 %v1180, %v1773
        %v1790 = vadd.f32 %v1181, %v1774
        %v1791 = vadd.f32 %v1182, %v1775
        %v1792 = vadd.f32 %v1183, %v1776
        %v1793 = vmul.f32 %v1777, 2.0
        %v1794 = vmul.f32 %v1778, 2.0
        %v1795 = vmul.f32 %v1779, 2.0
        %v1796 = vmul.f32 %v1780, 2.0
        %v1797 = vmul.f32 %v1781, 2.0
        %v1798 = vmul.f32 %v1782, 2.0
        %v1799 = vmul.f32 %v1783, 2.0
        %v1800 = vmul.f32 %v1784, 2.0
        %v1801 = vmul.f32 %v1785, 2.0
        %v1802 = vmul.f32 %v1786, 2.0
        %v1803 = vmul.f32 %v1787, 2.0
        %v1804 = vmul.f32 %v1788, 2.0
        %v1805 = vmul.f32 %v1789, 2.0
        %v1806 = vmul.f32 %v1790, 2.0
        %v1807 = vmul.f32 %v1791, 2.0
        %v1808 = vmul.f32 %v1792, 2.0
        %s1809 = scalar_lea.vmem %s369, 128 [#allocation7]
        %1810 = vst [vmem:[%s1809] sm:$0xff] %v1793
        %1811 = vst [vmem:[%s1809 + $0x8] sm:$0xff] %v1794
        %1812 = vst [vmem:[%s1809 + $0x10] sm:$0xff] %v1795
        %1813 = vst [vmem:[%s1809 + $0x18] sm:$0xff] %v1796
        %1814 = vst [vmem:[%s1809 + $0x20] sm:$0xff] %v1797
        %1815 = vst [vmem:[%s1809 + $0x28] sm:$0xff] %v1798
        %1816 = vst [vmem:[%s1809 + $0x30] sm:$0xff] %v1799
        %1817 = vst [vmem:[%s1809 + $0x38] sm:$0xff] %v1800
        %1818 = vst [vmem:[%s1809 + $0x40] sm:$0xff] %v1801
        %1819 = vst [vmem:[%s1809 + $0x48] sm:$0xff] %v1802
        %1820 = vst [vmem:[%s1809 + $0x50] sm:$0xff] %v1803
        %1821 = vst [vmem:[%s1809 + $0x58] sm:$0xff] %v1804
        %1822 = vst [vmem:[%s1809 + $0x60] sm:$0xff] %v1805
        %1823 = vst [vmem:[%s1809 + $0x68] sm:$0xff] %v1806
        %1824 = vst [vmem:[%s1809 + $0x70] sm:$0xff] %v1807
        %1825 = vst [vmem:[%s1809 + $0x78] sm:$0xff] %v1808
        %s1826 = sand.u32 %s214, 1
        %s1827 = scalar_lea.sflag [#allocation4], %s1826
        %s1828 = sand.u32 %s214, 1
        %s1829 = smul.addr %s1828, 256
        %s1830 = scalar_lea.vmem [#allocation7], %s1829
        // Predicated region
        $region61: #{tpu_custom_call.1} parent=51 // pred_check
          %p1831 = pneg %p224
        $region62: #{tpu_custom_call.1} parent=51 // pred_check_branch
          %1833 = sbr.rel (%p1831) target = $region64
        $region63: #{tpu_custom_call.1} parent=51 // pred_region
          %s1834 = smul.u32 2, %s28
          %1836 = vsyncadd %s1827, 0
          %s1837 = smul.addr %s1834, 16
          %s1838 = smul.addr %s1837, 8
          %s1839 = scalar_lea.hbm %s8, %s1838
          %s1840 = sshll.u32 %s1830, 4
          %s1841 = int_to_ptr.vmem [resolvable:$true] %s1840
          %s1842 = sshll.u32 %s1839, 4
          %s1843 = int_to_ptr.hbm [resolvable:$true] %s1842
          %1848 = dma.vmem_to_hbm [thread:$0]  %s1841, 4096, %s1843, %s1827, 256, 256, 16
        $region64: #{tpu_custom_call.1} parent=51 // pred_fallthru
          _
      $region52: #{tpu_custom_call.1} parent=5 // pred_fallthru
        _
      %p1849 = scmp.le.s32.totalorder 2, %s23
      // Predicated region
      $region65: #{tpu_custom_call.1} parent=5 // pred_check
        %p1850 = pneg %p1849
      $region66: #{tpu_custom_call.1} parent=5 // pred_check_branch
        %1852 = sbr.rel (%p1850) target = $region68
      $region67: #{tpu_custom_call.1} parent=5 // pred_region
        %s1853 = ssub.s32 %s23, 2
        // Predicated region
        $region69: #{tpu_custom_call.1} parent=67 // pred_check
          %p1854 = pneg %p230
        $region70: #{tpu_custom_call.1} parent=67 // pred_check_branch
          %1856 = sbr.rel (%p1854) target = $region72
        $region71: #{tpu_custom_call.1} parent=67 // pred_region
          %s1857 = sand.u32 %s215, 1
          %s1858 = scalar_lea.sflag [#allocation4], %s1857
          %s1859 = sand.u32 %s215, 1
          %s1860 = smul.addr %s1859, 256
          %s1861 = scalar_lea.vmem [#allocation7], %s1860
          %1863 = dma.done %s1858, 4096
        $region72: #{tpu_custom_call.1} parent=67 // pred_fallthru
          _
      $region68: #{tpu_custom_call.1} parent=5 // pred_fallthru
        _
    $region6: #{tpu_custom_call.1} parent=1 // loop_footer
      %s27 = sadd.s32 1, %s23
    $region7: #{tpu_custom_call.1} parent=1 // loop_footer_branch
      %22 = sbr.rel target = $region3
    $region8: #{tpu_custom_call.1} parent=1 // loop_exit
      _
    %1864 = vsyncpa [#allocation3], 1
    %s1865 = scalar_lea.sflag [#allocation3], 1
    %1866 = vsyncpa %s1865, 1
    %1867 = vsyncpa [#allocation6], 1
    %s1868 = scalar_lea.sflag [#allocation6], 1
    %1869 = vsyncpa %s1868, 1
    %1870 = vsyncpa [#allocation4], 1
    %s1871 = scalar_lea.sflag [#allocation4], 1
    %1872 = vsyncpa %s1871, 1

</llo_original>
